<compile_context>
chip_gen: v5e
topology: v5e:2x2
jax: 0.10.0
libtpu: 0.0.40
codegen_flags: <defaults>
</compile_context>

<pallas_src>
import jax
import jax.numpy as jnp
from jax.experimental import pallas as pl
from jax.experimental.pallas import tpu as pltpu


def _round_up(n, m):
    return ((n + m - 1) // m) * m


def _cdiv(a, b):
    return (a + b - 1) // b


def _pick_tile_b(B, tile_b_max=256):
    """Batch tile: minimise padding waste, prefer >=2 grid steps (megacore)."""
    b8 = _round_up(B, 8)
    if b8 <= 128:
        half = _round_up(_cdiv(B, 2), 8)
        return half if half < b8 else b8
    cands = [t for t in (64, 128, 256) if t <= tile_b_max] or [64]
    return min(cands, key=lambda t: (_round_up(B, t) - B, _cdiv(B, t) < 2, -t))


def _pick_tile_f(F, tile_f_max=2048, step_cost_cols=64):
    """Output-feature tile: balance column-padding waste vs per-grid-step overhead."""
    F_p128 = _round_up(F, 128)
    upper = max(128, min(tile_f_max, F_p128))
    best_t, best_cost = 128, None
    t = 128
    while t <= upper:
        cost = _round_up(F, t) + step_cost_cols * _cdiv(F, t)
        if best_cost is None or cost < best_cost:
            best_t, best_cost = t, cost
        t += 128
    return best_t


# ----------------------------------------------------------------------------
# Fused decoder kernel.
#   grid = (batch_tiles, feature_tiles)
#   refs = x, [categs], (wh, [wc], b) * n_hidden, wf_tile, [wcf_tile], bf_tile,
#          out_tile, h_scratch
# Hidden stack computed only when j == 0 (per batch tile) and cached in VMEM
# scratch; final layer uses the cached activations for every feature tile.
# ----------------------------------------------------------------------------
def _build_decoder_kernel(n_hidden, has_cat):
    def kernel(*refs):
        o_ref = refs[-2]
        h_ref = refs[-1]          # VMEM scratch (tile_b, H_p) f32

        idx = 0
        x_ref = refs[idx]; idx += 1
        c_ref = None
        if has_cat:
            c_ref = refs[idx]; idx += 1

        hidden = []
        for _ in range(n_hidden):
            wh = refs[idx]; idx += 1
            wc = None
            if has_cat:
                wc = refs[idx]; idx += 1
            b = refs[idx]; idx += 1
            hidden.append((wh, wc, b))

        wf_ref = refs[idx]; idx += 1
        wcf_ref = None
        if has_cat:
            wcf_ref = refs[idx]; idx += 1
        bf_ref = refs[idx]; idx += 1

        j = pl.program_id(1)

        # Hidden stack is independent of the output-feature tile: compute once per
        # batch tile and cache it.
        @pl.when(j == 0)
        def _():
            h = x_ref[...].astype(jnp.bfloat16)
            cats = c_ref[...].astype(jnp.bfloat16) if has_cat else None
            for wh, wc, b in hidden:
                y = jnp.dot(h, wh[...], preferred_element_type=jnp.float32)   # MXU (bf16)
                if has_cat:
                    y = y + jnp.dot(cats, wc[...], preferred_element_type=jnp.float32)
                y = y + b[...]                       # bias + folded BN shift (f32)
                y = jnp.maximum(y, 0.0)              # ReLU
                h = y.astype(jnp.bfloat16)
            h_ref[...] = h.astype(jnp.float32)

        # Final (un-activated) layer on this output-feature tile.
        h = h_ref[...].astype(jnp.bfloat16)
        y = jnp.dot(h, wf_ref[...], preferred_element_type=jnp.float32)
        if has_cat:
            y = y + jnp.dot(c_ref[...].astype(jnp.bfloat16), wcf_ref[...],
                            preferred_element_type=jnp.float32)
        y = y + bf_ref[...]
        o_ref[...] = y.astype(o_ref.dtype)

    return kernel


# ----------------------------------------------------------------------------
# Parameter construction (deterministic, mirrors Decoder.__init__ shapes)
# ----------------------------------------------------------------------------
def init_decoder_params(key, *, in_features, latent_dim, n_cat_list,
                        hidden_layers, neurons_per_layer):
    n_cat_eff = [n if n > 1 else 0 for n in (n_cat_list or [])]
    cat_dim = sum(n_cat_eff)

    ins = [latent_dim + cat_dim] + [neurons_per_layer + cat_dim] * (hidden_layers - 1)
    outs = [neurons_per_layer] * hidden_layers

    hidden = []
    for li, (k_in, k_out) in enumerate(zip(ins, outs)):
        kw, kb = jax.random.split(jax.random.fold_in(key, li))
        bound = float(k_in) ** -0.5
        w = jax.random.uniform(kw, (k_in, k_out), jnp.float32, -bound, bound)
        b = jax.random.uniform(kb, (k_out,), jnp.float32, -bound, bound)
        hidden.append(dict(
            w=w, b=b,
            gamma=jnp.ones((k_out,), jnp.float32),
            beta=jnp.zeros((k_out,), jnp.float32),
            mean=jnp.zeros((k_out,), jnp.float32),
            var=jnp.ones((k_out,), jnp.float32),
        ))

    k_in = neurons_per_layer + cat_dim
    kw, kb = jax.random.split(jax.random.fold_in(key, 1000))
    bound = float(k_in) ** -0.5
    w_f = jax.random.uniform(kw, (k_in, in_features), jnp.float32, -bound, bound)
    b_f = jax.random.uniform(kb, (in_features,), jnp.float32, -bound, bound)

    return dict(hidden=hidden, final=(w_f, b_f), n_cat_eff=n_cat_eff,
                latent_dim=latent_dim, neurons_per_layer=neurons_per_layer,
                in_features=in_features)


# ----------------------------------------------------------------------------
# Fold BN into weights/bias, split (W_h, W_cat), zero-pad to TPU shapes, cast
# weights to bf16.  Purely parameter-side work (once, off the hot path).
# ----------------------------------------------------------------------------
def prepare_fused_params(params, eps=1e-5, tile_f_max=2048, weight_dtype=jnp.bfloat16):
    n_cat_eff = params["n_cat_eff"]
    cat_dim = sum(n_cat_eff)
    has_cat = cat_dim > 0
    L = params["latent_dim"]
    H = params["neurons_per_layer"]
    F = params["in_features"]

    L_p = _round_up(L, 8)
    C_p = _round_up(cat_dim, 8) if has_cat else 0
    H_p = _round_up(H, 128)                 # lane-dense hidden activations
    tile_f = _pick_tile_f(F, tile_f_max)    # lane-dense, feature-tiled output
    F_p = _round_up(F, tile_f)

    hidden = []
    prev, prev_p = L, L_p
    for layer in params["hidden"]:
        scale = layer["gamma"] / jnp.sqrt(layer["var"] + eps)
        shift = layer["beta"] - layer["mean"] * scale
        w = layer["w"] * scale[None, :]
        b = layer["b"] * scale + shift
        wh = jnp.pad(w[:prev, :], ((0, prev_p - prev), (0, H_p - H))).astype(weight_dtype)
        wc = (jnp.pad(w[prev:, :], ((0, C_p - cat_dim), (0, H_p - H))).astype(weight_dtype)
              if has_cat else None)
        bb = jnp.pad(b, (0, H_p - H)).reshape(1, H_p).astype(jnp.float32)
        hidden.append((wh, wc, bb))
        prev, prev_p = H, H_p

    w_f, b_f = params["final"]
    whf = jnp.pad(w_f[:prev, :], ((0, prev_p - prev), (0, F_p - F))).astype(weight_dtype)
    wcf = (jnp.pad(w_f[prev:, :], ((0, C_p - cat_dim), (0, F_p - F))).astype(weight_dtype)
           if has_cat else None)
    bbf = jnp.pad(b_f, (0, F_p - F)).reshape(1, F_p).astype(jnp.float32)

    return dict(hidden=hidden, final=(whf, wcf, bbf), n_cat_eff=n_cat_eff,
                has_cat=has_cat, latent_dim=L, out_features=F,
                L_p=L_p, C_p=C_p, H_p=H_p, F_p=F_p, tile_f=tile_f)


# ----------------------------------------------------------------------------
# One-hot helper (shared by kernel path and reference)
# ----------------------------------------------------------------------------
def _make_categs(n_cat_eff, cat_list, dtype):
    cats = []
    for n_cat, cat in zip(n_cat_eff, cat_list):
        if n_cat > 1:
            cats.append(jax.nn.one_hot(cat.reshape(-1), n_cat, dtype=dtype))
    if cats:
        return jnp.concatenate(cats, axis=1)
    return None


# ----------------------------------------------------------------------------
# Forward: single fused pallas_call
# ----------------------------------------------------------------------------
def decoder_forward(fused, x, cat_list, out_dtype=jnp.float32):
    has_cat = fused["has_cat"]
    L, F = fused["latent_dim"], fused["out_features"]
    L_p, C_p, H_p, F_p = fused["L_p"], fused["C_p"], fused["H_p"], fused["F_p"]
    tile_f = fused["tile_f"]

    B = x.shape[0]
    tile_b = _pick_tile_b(B)
    B_pad = _round_up(B, tile_b)

    x_p = jnp.pad(x.astype(jnp.float32), ((0, B_pad - B), (0, L_p - L)))

    categs_p = None
    if has_cat:
        categs = _make_categs(fused["n_cat_eff"], cat_list, jnp.float32)
        C = categs.shape[1]
        categs_p = jnp.pad(categs, ((0, B_pad - B), (0, C_p - C)))

    grid = (B_pad // tile_b, F_p // tile_f)
    out_itemsize = jnp.dtype(out_dtype).itemsize

    def build_and_run(single_buffer_weights):
        resident_kw = (dict(pipeline_mode=pl.Buffered(1))
                       if single_buffer_weights else {})

        inputs = [x_p]
        in_specs = [pl.BlockSpec((tile_b, L_p), lambda i, j: (i, 0))]
        if has_cat:
            inputs.append(categs_p)
            in_specs.append(pl.BlockSpec((tile_b, C_p), lambda i, j: (i, 0)))

        resident_hbm = 0
        hidden_flops = 0
        for wh, wc, bb in fused["hidden"]:
            inputs.append(wh)
            in_specs.append(pl.BlockSpec(wh.shape, lambda i, j: (0, 0), **resident_kw))
            resident_hbm += wh.size * wh.dtype.itemsize
            hidden_flops += 2 * B_pad * wh.shape[0] * wh.shape[1]
            if has_cat:
                inputs.append(wc)
                in_specs.append(pl.BlockSpec(wc.shape, lambda i, j: (0, 0), **resident_kw))
                resident_hbm += wc.size * wc.dtype.itemsize
                hidden_flops += 2 * B_pad * wc.shape[0] * wc.shape[1]
            inputs.append(bb)
            in_specs.append(pl.BlockSpec(bb.shape, lambda i, j: (0, 0), **resident_kw))
            resident_hbm += bb.size * bb.dtype.itemsize

        whf, wcf, bbf = fused["final"]
        w_itemsize = whf.dtype.itemsize
        inputs.append(whf)
        in_specs.append(pl.BlockSpec((H_p, tile_f), lambda i, j: (0, j)))
        if has_cat:
            inputs.append(wcf)
            in_specs.append(pl.BlockSpec((C_p, tile_f), lambda i, j: (0, j)))
        inputs.append(bbf)
        in_specs.append(pl.BlockSpec((1, tile_f), lambda i, j: (0, j)))

        # --- VMEM budget (explicit, with headroom for Mosaic internals) ---
        resident_vmem = resident_hbm * (1 if single_buffer_weights else 2)
        streamed = tile_b * (L_p + C_p) * 4                       # x + categs (f32)
        streamed += (H_p + C_p) * tile_f * w_itemsize + tile_f * 4  # final W/b tiles
        streamed += tile_b * tile_f * out_itemsize                # output tile
        scratch_bytes = tile_b * H_p * 4
        vmem_limit = int((resident_vmem + 2 * streamed + scratch_bytes) * 1.3) + (2 << 20)
        vmem_limit = max(vmem_limit, 32 << 20)
        vmem_limit = min(vmem_limit, 100 << 20)

        # --- advisory cost estimate ---
        final_flops = 2 * B_pad * (H_p + C_p) * F_p
        n_btiles = B_pad // tile_b
        bytes_accessed = (x_p.size * 4
                          + (categs_p.size * 4 if has_cat else 0)
                          + resident_hbm
                          + n_btiles * ((H_p + C_p) * F_p * w_itemsize + F_p * 4)
                          + B_pad * F_p * out_itemsize)

        kernel = _build_decoder_kernel(len(fused["hidden"]), has_cat)
        return pl.pallas_call(
            kernel,
            out_shape=jax.ShapeDtypeStruct((B_pad, F_p), out_dtype),
            grid=grid,
            in_specs=in_specs,
            out_specs=pl.BlockSpec((tile_b, tile_f), lambda i, j: (i, j)),
            scratch_shapes=[pltpu.VMEM((tile_b, H_p), jnp.float32)],
            compiler_params=pltpu.CompilerParams(
                dimension_semantics=("parallel", "arbitrary"),
                vmem_limit_bytes=vmem_limit),
            cost_estimate=pl.CostEstimate(
                flops=int(hidden_flops + final_flops),
                transcendentals=0,
                bytes_accessed=int(bytes_accessed)),
        )(*inputs)

    try:
        out = build_and_run(True)
    except Exception:
        # Fallback if single-buffered (pl.Buffered(1)) resident weights are not
        # supported by this Pallas build; semantics are identical.
        out = build_and_run(False)

    return out[:B, :F]


# ----------------------------------------------------------------------------
# Pure-JAX f32 reference (matches the PyTorch module in eval mode, concat style)
# ----------------------------------------------------------------------------
def decoder_forward_ref(params, x, cat_list, eps=1e-5):
    categs = _make_categs(params["n_cat_eff"], cat_list, x.dtype)
    h = x
    for layer in params["hidden"]:
        inp = jnp.concatenate([h, categs], axis=1) if categs is not None else h
        z = inp @ layer["w"] + layer["b"]
        z = (z - layer["mean"]) / jnp.sqrt(layer["var"] + eps) * layer["gamma"] + layer["beta"]
        h = jnp.maximum(z, 0.0)
    inp = jnp.concatenate([h, categs], axis=1) if categs is not None else h
    w_f, b_f = params["final"]
    return inp @ w_f + b_f


# ----------------------------------------------------------------------------
if __name__ == "__main__":
    key = jax.random.PRNGKey(0)

    # small, module-consistent shapes; chosen so BOTH grid axes have >1 step
    B, latent_dim, in_features = 24, 16, 200
    hidden_layers, neurons_per_layer = 2, 32
    n_cat_list = [3, 1, 4]          # the '1' category is dropped (n_cat <= 1)

    k_p, k_x, k_c0, k_c1, k_c2 = jax.random.split(key, 5)
    params = init_decoder_params(
        k_p, in_features=in_features, latent_dim=latent_dim,
        n_cat_list=n_cat_list, hidden_layers=hidden_layers,
        neurons_per_layer=neurons_per_layer)
    # tile_f_max=128 only to exercise the feature-tiled grid axis at test size;
    # production default is 2048.
    fused = prepare_fused_params(params, tile_f_max=128)

    x = jax.random.normal(k_x, (B, latent_dim), jnp.float32)
    cat_list = [
        jax.random.randint(k_c0, (B, 1), 0, 3),
        jax.random.randint(k_c1, (B, 1), 0, 1),
        jax.random.randint(k_c2, (B, 1), 0, 4),
    ]

    out = decoder_forward(fused, x, cat_list)
    out = jax.block_until_ready(out)

    ref = decoder_forward_ref(params, x, cat_list)
    assert out.shape == (B, in_features), out.shape
    # bf16 MXU operands (f32 accumulation) -> relaxed tolerance vs the f32 reference
    err = float(jnp.max(jnp.abs(out - ref)))
    assert jnp.allclose(out, ref, atol=5e-2, rtol=5e-2), f"mismatch vs reference: {err}"

    print("KERNEL_OK")
</pallas_src>

<mosaic_0001>
module attributes {stable_mosaic.version = 11 : i64} {
  func.func @kernel(%arg0: i32, %arg1: i32, %arg2: memref<16x16xf32, #tpu.memory_space<vmem>>, %arg3: memref<16x8xf32, #tpu.memory_space<vmem>>, %arg4: memref<16x128xbf16, #tpu.memory_space<vmem>>, %arg5: memref<8x128xbf16, #tpu.memory_space<vmem>>, %arg6: memref<1x128xf32, #tpu.memory_space<vmem>>, %arg7: memref<128x128xbf16, #tpu.memory_space<vmem>>, %arg8: memref<8x128xbf16, #tpu.memory_space<vmem>>, %arg9: memref<1x128xf32, #tpu.memory_space<vmem>>, %arg10: memref<128x128xbf16, #tpu.memory_space<vmem>>, %arg11: memref<8x128xbf16, #tpu.memory_space<vmem>>, %arg12: memref<1x128xf32, #tpu.memory_space<vmem>>, %arg13: memref<16x128xf32, #tpu.memory_space<vmem>>, %arg14: memref<16x128xf32, #tpu.memory_space<vmem>>) attributes {dimension_semantics = [#tpu.dimension_semantics<parallel>, #tpu.dimension_semantics<arbitrary>], iteration_bounds = array<i64: 2, 2>, scalar_prefetch = 0 : i64, scratch_operands = 1 : i64, tpu.core_type = #tpu.core_type<tc>, window_params = [{transform_indices = @transform_0, window_bounds = array<i64: 16, 16>}, {transform_indices = @transform_1, window_bounds = array<i64: 16, 8>}, {pipeline_mode = #tpu.pipeline_mode<synchronous>, transform_indices = @transform_2, window_bounds = array<i64: 16, 128>}, {pipeline_mode = #tpu.pipeline_mode<synchronous>, transform_indices = @transform_3, window_bounds = array<i64: 8, 128>}, {pipeline_mode = #tpu.pipeline_mode<synchronous>, transform_indices = @transform_4, window_bounds = array<i64: 1, 128>}, {pipeline_mode = #tpu.pipeline_mode<synchronous>, transform_indices = @transform_5, window_bounds = array<i64: 128, 128>}, {pipeline_mode = #tpu.pipeline_mode<synchronous>, transform_indices = @transform_6, window_bounds = array<i64: 8, 128>}, {pipeline_mode = #tpu.pipeline_mode<synchronous>, transform_indices = @transform_7, window_bounds = array<i64: 1, 128>}, {transform_indices = @transform_8, window_bounds = array<i64: 128, 128>}, {transform_indices = @transform_9, window_bounds = array<i64: 8, 128>}, {transform_indices = @transform_10, window_bounds = array<i64: 1, 128>}, {transform_indices = @transform_11, window_bounds = array<i64: 16, 128>}]} {
    %c0_i32 = arith.constant 0 : i32
    %0 = arith.cmpi eq, %arg1, %c0_i32 : i32
    %1 = arith.extui %0 : i1 to i32
    %c0_i32_0 = arith.constant 0 : i32
    %2 = arith.cmpi ne, %1, %c0_i32_0 : i32
    scf.if %2 {
      %c0_13 = arith.constant 0 : index
      %c0_14 = arith.constant 0 : index
      %16 = vector.load %arg2[%c0_13, %c0_14] : memref<16x16xf32, #tpu.memory_space<vmem>>, vector<16x16xf32>
      %17 = arith.truncf %16 : vector<16x16xf32> to vector<16x16xbf16>
      %c0_15 = arith.constant 0 : index
      %c0_16 = arith.constant 0 : index
      %18 = vector.load %arg3[%c0_15, %c0_16] : memref<16x8xf32, #tpu.memory_space<vmem>>, vector<16x8xf32>
      %19 = arith.truncf %18 : vector<16x8xf32> to vector<16x8xbf16>
      %c0_17 = arith.constant 0 : index
      %c0_18 = arith.constant 0 : index
      %20 = vector.load %arg4[%c0_17, %c0_18] : memref<16x128xbf16, #tpu.memory_space<vmem>>, vector<16x128xbf16>
      %cst_19 = arith.constant dense<0.000000e+00> : vector<16x128xf32>
      %21 = tpu.matmul %17, %20, %cst_19 {dimension_numbers = #tpu.dot_dimension_numbers<[1], [0], [0], [1], [0, 0, 1, 1], [], []>} : vector<16x16xbf16>, vector<16x128xbf16>, vector<16x128xf32> -> vector<16x128xf32>
      %c0_20 = arith.constant 0 : index
      %c0_21 = arith.constant 0 : index
      %22 = vector.load %arg5[%c0_20, %c0_21] : memref<8x128xbf16, #tpu.memory_space<vmem>>, vector<8x128xbf16>
      %cst_22 = arith.constant dense<0.000000e+00> : vector<16x128xf32>
      %23 = tpu.matmul %19, %22, %cst_22 {dimension_numbers = #tpu.dot_dimension_numbers<[1], [0], [0], [1], [0, 0, 1, 1], [], []>} : vector<16x8xbf16>, vector<8x128xbf16>, vector<16x128xf32> -> vector<16x128xf32>
      %24 = arith.addf %21, %23 : vector<16x128xf32>
      %c0_23 = arith.constant 0 : index
      %c0_24 = arith.constant 0 : index
      %25 = vector.load %arg6[%c0_23, %c0_24] : memref<1x128xf32, #tpu.memory_space<vmem>>, vector<1x128xf32>
      %26 = vector.broadcast %25 : vector<1x128xf32> to vector<16x128xf32>
      %27 = arith.addf %24, %26 : vector<16x128xf32>
      %cst_25 = arith.constant 0.000000e+00 : f32
      %28 = vector.broadcast %cst_25 : f32 to vector<16x128xf32>
      %29 = arith.maximumf %27, %28 : vector<16x128xf32>
      %30 = arith.truncf %29 : vector<16x128xf32> to vector<16x128xbf16>
      %c0_26 = arith.constant 0 : index
      %c0_27 = arith.constant 0 : index
      %31 = vector.load %arg7[%c0_26, %c0_27] : memref<128x128xbf16, #tpu.memory_space<vmem>>, vector<128x128xbf16>
      %cst_28 = arith.constant dense<0.000000e+00> : vector<16x128xf32>
      %32 = tpu.matmul %30, %31, %cst_28 {dimension_numbers = #tpu.dot_dimension_numbers<[1], [0], [0], [1], [0, 0, 1, 1], [], []>} : vector<16x128xbf16>, vector<128x128xbf16>, vector<16x128xf32> -> vector<16x128xf32>
      %c0_29 = arith.constant 0 : index
      %c0_30 = arith.constant 0 : index
      %33 = vector.load %arg8[%c0_29, %c0_30] : memref<8x128xbf16, #tpu.memory_space<vmem>>, vector<8x128xbf16>
      %cst_31 = arith.constant dense<0.000000e+00> : vector<16x128xf32>
      %34 = tpu.matmul %19, %33, %cst_31 {dimension_numbers = #tpu.dot_dimension_numbers<[1], [0], [0], [1], [0, 0, 1, 1], [], []>} : vector<16x8xbf16>, vector<8x128xbf16>, vector<16x128xf32> -> vector<16x128xf32>
      %35 = arith.addf %32, %34 : vector<16x128xf32>
      %c0_32 = arith.constant 0 : index
      %c0_33 = arith.constant 0 : index
      %36 = vector.load %arg9[%c0_32, %c0_33] : memref<1x128xf32, #tpu.memory_space<vmem>>, vector<1x128xf32>
      %37 = vector.broadcast %36 : vector<1x128xf32> to vector<16x128xf32>
      %38 = arith.addf %35, %37 : vector<16x128xf32>
      %cst_34 = arith.constant 0.000000e+00 : f32
      %39 = vector.broadcast %cst_34 : f32 to vector<16x128xf32>
      %40 = arith.maximumf %38, %39 : vector<16x128xf32>
      %41 = arith.truncf %40 : vector<16x128xf32> to vector<16x128xbf16>
      %42 = arith.extf %41 : vector<16x128xbf16> to vector<16x128xf32>
      %c0_35 = arith.constant 0 : index
      %c0_36 = arith.constant 0 : index
      %43 = vector.load %arg14[%c0_35, %c0_36] : memref<16x128xf32, #tpu.memory_space<vmem>>, vector<16x128xf32>
      tpu.vector_store %arg14[%c0_35, %c0_36], %42 {strides = array<i32>} : memref<16x128xf32, #tpu.memory_space<vmem>>, vector<16x128xf32>,
    } else {
    }
    %c0 = arith.constant 0 : index
    %c0_1 = arith.constant 0 : index
    %3 = vector.load %arg14[%c0, %c0_1] : memref<16x128xf32, #tpu.memory_space<vmem>>, vector<16x128xf32>
    %4 = arith.truncf %3 : vector<16x128xf32> to vector<16x128xbf16>
    %c0_2 = arith.constant 0 : index
    %c0_3 = arith.constant 0 : index
    %5 = vector.load %arg10[%c0_2, %c0_3] : memref<128x128xbf16, #tpu.memory_space<vmem>>, vector<128x128xbf16>
    %cst = arith.constant dense<0.000000e+00> : vector<16x128xf32>
    %6 = tpu.matmul %4, %5, %cst {dimension_numbers = #tpu.dot_dimension_numbers<[1], [0], [0], [1], [0, 0, 1, 1], [], []>} : vector<16x128xbf16>, vector<128x128xbf16>, vector<16x128xf32> -> vector<16x128xf32>
    %c0_4 = arith.constant 0 : index
    %c0_5 = arith.constant 0 : index
    %7 = vector.load %arg3[%c0_4, %c0_5] : memref<16x8xf32, #tpu.memory_space<vmem>>, vector<16x8xf32>
    %8 = arith.truncf %7 : vector<16x8xf32> to vector<16x8xbf16>
    %c0_6 = arith.constant 0 : index
    %c0_7 = arith.constant 0 : index
    %9 = vector.load %arg11[%c0_6, %c0_7] : memref<8x128xbf16, #tpu.memory_space<vmem>>, vector<8x128xbf16>
    %cst_8 = arith.constant dense<0.000000e+00> : vector<16x128xf32>
    %10 = tpu.matmul %8, %9, %cst_8 {dimension_numbers = #tpu.dot_dimension_numbers<[1], [0], [0], [1], [0, 0, 1, 1], [], []>} : vector<16x8xbf16>, vector<8x128xbf16>, vector<16x128xf32> -> vector<16x128xf32>
    %11 = arith.addf %6, %10 : vector<16x128xf32>
    %c0_9 = arith.constant 0 : index
    %c0_10 = arith.constant 0 : index
    %12 = vector.load %arg12[%c0_9, %c0_10] : memref<1x128xf32, #tpu.memory_space<vmem>>, vector<1x128xf32>
    %13 = vector.broadcast %12 : vector<1x128xf32> to vector<16x128xf32>
    %14 = arith.addf %11, %13 : vector<16x128xf32>
    %c0_11 = arith.constant 0 : index
    %c0_12 = arith.constant 0 : index
    %15 = vector.load %arg13[%c0_11, %c0_12] : memref<16x128xf32, #tpu.memory_space<vmem>>, vector<16x128xf32>
    tpu.vector_store %arg13[%c0_11, %c0_12], %14 {strides = array<i32>} : memref<16x128xf32, #tpu.memory_space<vmem>>, vector<16x128xf32>,
    return
  }
  func.func @transform_0(%arg0: i32, %arg1: i32) -> (i32, i32) {
    %c0_i32 = arith.constant 0 : i32
    %c0_i32_0 = arith.constant 0 : i32
    return %arg0, %c0_i32 : i32, i32
  }
  func.func @transform_1(%arg0: i32, %arg1: i32) -> (i32, i32) {
    %c0_i32 = arith.constant 0 : i32
    %c0_i32_0 = arith.constant 0 : i32
    return %arg0, %c0_i32 : i32, i32
  }
  func.func @transform_2(%arg0: i32, %arg1: i32) -> (i32, i32) {
    %c0_i32 = arith.constant 0 : i32
    %c0_i32_0 = arith.constant 0 : i32
    %c0_i32_1 = arith.constant 0 : i32
    return %c0_i32, %c0_i32_0 : i32, i32
  }
  func.func @transform_3(%arg0: i32, %arg1: i32) -> (i32, i32) {
    %c0_i32 = arith.constant 0 : i32
    %c0_i32_0 = arith.constant 0 : i32
    %c0_i32_1 = arith.constant 0 : i32
    return %c0_i32, %c0_i32_0 : i32, i32
  }
  func.func @transform_4(%arg0: i32, %arg1: i32) -> (i32, i32) {
    %c0_i32 = arith.constant 0 : i32
    %c0_i32_0 = arith.constant 0 : i32
    %c0_i32_1 = arith.constant 0 : i32
    return %c0_i32, %c0_i32_0 : i32, i32
  }
  func.func @transform_5(%arg0: i32, %arg1: i32) -> (i32, i32) {
    %c0_i32 = arith.constant 0 : i32
    %c0_i32_0 = arith.constant 0 : i32
    %c0_i32_1 = arith.constant 0 : i32
    return %c0_i32, %c0_i32_0 : i32, i32
  }
  func.func @transform_6(%arg0: i32, %arg1: i32) -> (i32, i32) {
    %c0_i32 = arith.constant 0 : i32
    %c0_i32_0 = arith.constant 0 : i32
    %c0_i32_1 = arith.constant 0 : i32
    return %c0_i32, %c0_i32_0 : i32, i32
  }
  func.func @transform_7(%arg0: i32, %arg1: i32) -> (i32, i32) {
    %c0_i32 = arith.constant 0 : i32
    %c0_i32_0 = arith.constant 0 : i32
    %c0_i32_1 = arith.constant 0 : i32
    return %c0_i32, %c0_i32_0 : i32, i32
  }
  func.func @transform_8(%arg0: i32, %arg1: i32) -> (i32, i32) {
    %c0_i32 = arith.constant 0 : i32
    %c0_i32_0 = arith.constant 0 : i32
    return %c0_i32, %arg1 : i32, i32
  }
  func.func @transform_9(%arg0: i32, %arg1: i32) -> (i32, i32) {
    %c0_i32 = arith.constant 0 : i32
    %c0_i32_0 = arith.constant 0 : i32
    return %c0_i32, %arg1 : i32, i32
  }
  func.func @transform_10(%arg0: i32, %arg1: i32) -> (i32, i32) {
    %c0_i32 = arith.constant 0 : i32
    %c0_i32_0 = arith.constant 0 : i32
    return %c0_i32, %arg1 : i32, i32
  }
  func.func @transform_11(%arg0: i32, %arg1: i32) -> (i32, i32) {
    %c0_i32 = arith.constant 0 : i32
    return %arg0, %arg1 : i32, i32
  }
}

module attributes {stable_mosaic.version = 11 : i64} {
  func.func @kernel(%arg0: i32, %arg1: i32, %arg2: memref<16x16xf32, #tpu.memory_space<vmem>>, %arg3: memref<16x8xf32, #tpu.memory_space<vmem>>, %arg4: memref<16x128xbf16, #tpu.memory_space<vmem>>, %arg5: memref<8x128xbf16, #tpu.memory_space<vmem>>, %arg6: memref<1x128xf32, #tpu.memory_space<vmem>>, %arg7: memref<128x128xbf16, #tpu.memory_space<vmem>>, %arg8: memref<8x128xbf16, #tpu.memory_space<vmem>>, %arg9: memref<1x128xf32, #tpu.memory_space<vmem>>, %arg10: memref<128x128xbf16, #tpu.memory_space<vmem>>, %arg11: memref<8x128xbf16, #tpu.memory_space<vmem>>, %arg12: memref<1x128xf32, #tpu.memory_space<vmem>>, %arg13: memref<16x128xf32, #tpu.memory_space<vmem>>, %arg14: memref<16x128xf32, #tpu.memory_space<vmem>>) attributes {dimension_semantics = [#tpu.dimension_semantics<parallel>, #tpu.dimension_semantics<arbitrary>], iteration_bounds = array<i64: 2, 2>, scalar_prefetch = 0 : i64, scratch_operands = 1 : i64, tpu.core_type = #tpu.core_type<tc>, window_params = [{transform_indices = @transform_0, window_bounds = array<i64: 16, 16>}, {transform_indices = @transform_1, window_bounds = array<i64: 16, 8>}, {pipeline_mode = #tpu.pipeline_mode<synchronous>, transform_indices = @transform_2, window_bounds = array<i64: 16, 128>}, {pipeline_mode = #tpu.pipeline_mode<synchronous>, transform_indices = @transform_3, window_bounds = array<i64: 8, 128>}, {pipeline_mode = #tpu.pipeline_mode<synchronous>, transform_indices = @transform_4, window_bounds = array<i64: 1, 128>}, {pipeline_mode = #tpu.pipeline_mode<synchronous>, transform_indices = @transform_5, window_bounds = array<i64: 128, 128>}, {pipeline_mode = #tpu.pipeline_mode<synchronous>, transform_indices = @transform_6, window_bounds = array<i64: 8, 128>}, {pipeline_mode = #tpu.pipeline_mode<synchronous>, transform_indices = @transform_7, window_bounds = array<i64: 1, 128>}, {transform_indices = @transform_8, window_bounds = array<i64: 128, 128>}, {transform_indices = @transform_9, window_bounds = array<i64: 8, 128>}, {transform_indices = @transform_10, window_bounds = array<i64: 1, 128>}, {transform_indices = @transform_11, window_bounds = array<i64: 16, 128>}]} {
    %c0_i32 = arith.constant 0 : i32
    %0 = arith.cmpi eq, %arg1, %c0_i32 : i32
    %1 = arith.extui %0 : i1 to i32
    %c0_i32_0 = arith.constant 0 : i32
    %2 = arith.cmpi ne, %1, %c0_i32_0 : i32
    scf.if %2 {
      %c0_13 = arith.constant 0 : index
      %c0_14 = arith.constant 0 : index
      %16 = vector.load %arg2[%c0_13, %c0_14] : memref<16x16xf32, #tpu.memory_space<vmem>>, vector<16x16xf32>
      %17 = arith.truncf %16 : vector<16x16xf32> to vector<16x16xbf16>
      %c0_15 = arith.constant 0 : index
      %c0_16 = arith.constant 0 : index
      %18 = vector.load %arg3[%c0_15, %c0_16] : memref<16x8xf32, #tpu.memory_space<vmem>>, vector<16x8xf32>
      %19 = arith.truncf %18 : vector<16x8xf32> to vector<16x8xbf16>
      %c0_17 = arith.constant 0 : index
      %c0_18 = arith.constant 0 : index
      %20 = vector.load %arg4[%c0_17, %c0_18] : memref<16x128xbf16, #tpu.memory_space<vmem>>, vector<16x128xbf16>
      %cst_19 = arith.constant dense<0.000000e+00> : vector<16x128xf32>
      %21 = tpu.matmul %17, %20, %cst_19 {dimension_numbers = #tpu.dot_dimension_numbers<[1], [0], [0], [1], [0, 0, 1, 1], [], []>} : vector<16x16xbf16>, vector<16x128xbf16>, vector<16x128xf32> -> vector<16x128xf32>
      %c0_20 = arith.constant 0 : index
      %c0_21 = arith.constant 0 : index
      %22 = vector.load %arg5[%c0_20, %c0_21] : memref<8x128xbf16, #tpu.memory_space<vmem>>, vector<8x128xbf16>
      %cst_22 = arith.constant dense<0.000000e+00> : vector<16x128xf32>
      %23 = tpu.matmul %19, %22, %cst_22 {dimension_numbers = #tpu.dot_dimension_numbers<[1], [0], [0], [1], [0, 0, 1, 1], [], []>} : vector<16x8xbf16>, vector<8x128xbf16>, vector<16x128xf32> -> vector<16x128xf32>
      %24 = arith.addf %21, %23 : vector<16x128xf32>
      %c0_23 = arith.constant 0 : index
      %c0_24 = arith.constant 0 : index
      %25 = vector.load %arg6[%c0_23, %c0_24] : memref<1x128xf32, #tpu.memory_space<vmem>>, vector<1x128xf32>
      %26 = vector.broadcast %25 : vector<1x128xf32> to vector<16x128xf32>
      %27 = arith.addf %24, %26 : vector<16x128xf32>
      %cst_25 = arith.constant 0.000000e+00 : f32
      %28 = vector.broadcast %cst_25 : f32 to vector<16x128xf32>
      %29 = arith.maximumf %27, %28 : vector<16x128xf32>
      %30 = arith.truncf %29 : vector<16x128xf32> to vector<16x128xbf16>
      %c0_26 = arith.constant 0 : index
      %c0_27 = arith.constant 0 : index
      %31 = vector.load %arg7[%c0_26, %c0_27] : memref<128x128xbf16, #tpu.memory_space<vmem>>, vector<128x128xbf16>
      %cst_28 = arith.constant dense<0.000000e+00> : vector<16x128xf32>
      %32 = tpu.matmul %30, %31, %cst_28 {dimension_numbers = #tpu.dot_dimension_numbers<[1], [0], [0], [1], [0, 0, 1, 1], [], []>} : vector<16x128xbf16>, vector<128x128xbf16>, vector<16x128xf32> -> vector<16x128xf32>
      %c0_29 = arith.constant 0 : index
      %c0_30 = arith.constant 0 : index
      %33 = vector.load %arg8[%c0_29, %c0_30] : memref<8x128xbf16, #tpu.memory_space<vmem>>, vector<8x128xbf16>
      %cst_31 = arith.constant dense<0.000000e+00> : vector<16x128xf32>
      %34 = tpu.matmul %19, %33, %cst_31 {dimension_numbers = #tpu.dot_dimension_numbers<[1], [0], [0], [1], [0, 0, 1, 1], [], []>} : vector<16x8xbf16>, vector<8x128xbf16>, vector<16x128xf32> -> vector<16x128xf32>
      %35 = arith.addf %32, %34 : vector<16x128xf32>
      %c0_32 = arith.constant 0 : index
      %c0_33 = arith.constant 0 : index
      %36 = vector.load %arg9[%c0_32, %c0_33] : memref<1x128xf32, #tpu.memory_space<vmem>>, vector<1x128xf32>
      %37 = vector.broadcast %36 : vector<1x128xf32> to vector<16x128xf32>
      %38 = arith.addf %35, %37 : vector<16x128xf32>
      %cst_34 = arith.constant 0.000000e+00 : f32
      %39 = vector.broadcast %cst_34 : f32 to vector<16x128xf32>
      %40 = arith.maximumf %38, %39 : vector<16x128xf32>
      %41 = arith.truncf %40 : vector<16x128xf32> to vector<16x128xbf16>
      %42 = arith.extf %41 : vector<16x128xbf16> to vector<16x128xf32>
      %c0_35 = arith.constant 0 : index
      %c0_36 = arith.constant 0 : index
      %43 = vector.load %arg14[%c0_35, %c0_36] : memref<16x128xf32, #tpu.memory_space<vmem>>, vector<16x128xf32>
      tpu.vector_store %arg14[%c0_35, %c0_36], %42 {strides = array<i32>} : memref<16x128xf32, #tpu.memory_space<vmem>>, vector<16x128xf32>,
    } else {
    }
    %c0 = arith.constant 0 : index
    %c0_1 = arith.constant 0 : index
    %3 = vector.load %arg14[%c0, %c0_1] : memref<16x128xf32, #tpu.memory_space<vmem>>, vector<16x128xf32>
    %4 = arith.truncf %3 : vector<16x128xf32> to vector<16x128xbf16>
    %c0_2 = arith.constant 0 : index
    %c0_3 = arith.constant 0 : index
    %5 = vector.load %arg10[%c0_2, %c0_3] : memref<128x128xbf16, #tpu.memory_space<vmem>>, vector<128x128xbf16>
    %cst = arith.constant dense<0.000000e+00> : vector<16x128xf32>
    %6 = tpu.matmul %4, %5, %cst {dimension_numbers = #tpu.dot_dimension_numbers<[1], [0], [0], [1], [0, 0, 1, 1], [], []>} : vector<16x128xbf16>, vector<128x128xbf16>, vector<16x128xf32> -> vector<16x128xf32>
    %c0_4 = arith.constant 0 : index
    %c0_5 = arith.constant 0 : index
    %7 = vector.load %arg3[%c0_4, %c0_5] : memref<16x8xf32, #tpu.memory_space<vmem>>, vector<16x8xf32>
    %8 = arith.truncf %7 : vector<16x8xf32> to vector<16x8xbf16>
    %c0_6 = arith.constant 0 : index
    %c0_7 = arith.constant 0 : index
    %9 = vector.load %arg11[%c0_6, %c0_7] : memref<8x128xbf16, #tpu.memory_space<vmem>>, vector<8x128xbf16>
    %cst_8 = arith.constant dense<0.000000e+00> : vector<16x128xf32>
    %10 = tpu.matmul %8, %9, %cst_8 {dimension_numbers = #tpu.dot_dimension_numbers<[1], [0], [0], [1], [0, 0, 1, 1], [], []>} : vector<16x8xbf16>, vector<8x128xbf16>, vector<16x128xf32> -> vector<16x128xf32>
    %11 = arith.addf %6, %10 : vector<16x128xf32>
    %c0_9 = arith.constant 0 : index
    %c0_10 = arith.constant 0 : index
    %12 = vector.load %arg12[%c0_9, %c0_10] : memref<1x128xf32, #tpu.memory_space<vmem>>, vector<1x128xf32>
    %13 = vector.broadcast %12 : vector<1x128xf32> to vector<16x128xf32>
    %14 = arith.addf %11, %13 : vector<16x128xf32>
    %c0_11 = arith.constant 0 : index
    %c0_12 = arith.constant 0 : index
    %15 = vector.load %arg13[%c0_11, %c0_12] : memref<16x128xf32, #tpu.memory_space<vmem>>, vector<16x128xf32>
    tpu.vector_store %arg13[%c0_11, %c0_12], %14 {strides = array<i32>} : memref<16x128xf32, #tpu.memory_space<vmem>>, vector<16x128xf32>,
    return
  }
  func.func @transform_0(%arg0: i32, %arg1: i32) -> (i32, i32) {
    %c0_i32 = arith.constant 0 : i32
    %c0_i32_0 = arith.constant 0 : i32
    return %arg0, %c0_i32 : i32, i32
  }
  func.func @transform_1(%arg0: i32, %arg1: i32) -> (i32, i32) {
    %c0_i32 = arith.constant 0 : i32
    %c0_i32_0 = arith.constant 0 : i32
    return %arg0, %c0_i32 : i32, i32
  }
  func.func @transform_2(%arg0: i32, %arg1: i32) -> (i32, i32) {
    %c0_i32 = arith.constant 0 : i32
    %c0_i32_0 = arith.constant 0 : i32
    %c0_i32_1 = arith.constant 0 : i32
    return %c0_i32, %c0_i32_0 : i32, i32
  }
  func.func @transform_3(%arg0: i32, %arg1: i32) -> (i32, i32) {
    %c0_i32 = arith.constant 0 : i32
    %c0_i32_0 = arith.constant 0 : i32
    %c0_i32_1 = arith.constant 0 : i32
    return %c0_i32, %c0_i32_0 : i32, i32
  }
  func.func @transform_4(%arg0: i32, %arg1: i32) -> (i32, i32) {
    %c0_i32 = arith.constant 0 : i32
    %c0_i32_0 = arith.constant 0 : i32
    %c0_i32_1 = arith.constant 0 : i32
    return %c0_i32, %c0_i32_0 : i32, i32
  }
  func.func @transform_5(%arg0: i32, %arg1: i32) -> (i32, i32) {
    %c0_i32 = arith.constant 0 : i32
    %c0_i32_0 = arith.constant 0 : i32
    %c0_i32_1 = arith.constant 0 : i32
    return %c0_i32, %c0_i32_0 : i32, i32
  }
  func.func @transform_6(%arg0: i32, %arg1: i32) -> (i32, i32) {
    %c0_i32 = arith.constant 0 : i32
    %c0_i32_0 = arith.constant 0 : i32
    %c0_i32_1 = arith.constant 0 : i32
    return %c0_i32, %c0_i32_0 : i32, i32
  }
  func.func @transform_7(%arg0: i32, %arg1: i32) -> (i32, i32) {
    %c0_i32 = arith.constant 0 : i32
    %c0_i32_0 = arith.constant 0 : i32
    %c0_i32_1 = arith.constant 0 : i32
    return %c0_i32, %c0_i32_0 : i32, i32
  }
  func.func @transform_8(%arg0: i32, %arg1: i32) -> (i32, i32) {
    %c0_i32 = arith.constant 0 : i32
    %c0_i32_0 = arith.constant 0 : i32
    return %c0_i32, %arg1 : i32, i32
  }
  func.func @transform_9(%arg0: i32, %arg1: i32) -> (i32, i32) {
    %c0_i32 = arith.constant 0 : i32
    %c0_i32_0 = arith.constant 0 : i32
    return %c0_i32, %arg1 : i32, i32
  }
  func.func @transform_10(%arg0: i32, %arg1: i32) -> (i32, i32) {
    %c0_i32 = arith.constant 0 : i32
    %c0_i32_0 = arith.constant 0 : i32
    return %c0_i32, %arg1 : i32, i32
  }
  func.func @transform_11(%arg0: i32, %arg1: i32) -> (i32, i32) {
    %c0_i32 = arith.constant 0 : i32
    return %arg0, %arg1 : i32, i32
  }
}

</mosaic_0001>

<llo_original>
// kernel: tpu_custom_call.1
$region0: #{tpu_custom_call.1}
  #allocation0 [shape = 'u32[]', space=smem, size = 0x4, offset = 0x4, fixed_abs, tag = 'smem constant byte address 0x4 - core index']
  #allocation1 [shape = 'u32[72,128]{1,0:T(1,128)}', space=vmem, size = 0x9000, scoped, tag = 'internal scratch']
  #allocation2 [shape = 'f32[16,128]{1,0:T(8,128)}', space=vmem, size = 0x2000, scoped, tag = 'scratch operand']
  %s0 = inlined_call_operand.vmem [shape: f32[32,16], index: 0, kind: input, shape index: {}]
  %s1 = inlined_call_operand.vmem [shape: f32[32,8], index: 1, kind: input, shape index: {}]
  %s2 = inlined_call_operand.vmem [shape: bf16[16,128], index: 2, kind: input, shape index: {}]
  %s3 = inlined_call_operand.vmem [shape: bf16[8,128], index: 3, kind: input, shape index: {}]
  %s4 = inlined_call_operand.vmem [shape: f32[1,128], index: 4, kind: input, shape index: {}]
  %s5 = inlined_call_operand.vmem [shape: bf16[128,128], index: 5, kind: input, shape index: {}]
  %s6 = inlined_call_operand.vmem [shape: bf16[8,128], index: 6, kind: input, shape index: {}]
  %s7 = inlined_call_operand.vmem [shape: f32[1,128], index: 7, kind: input, shape index: {}]
  %s8 = inlined_call_operand.hbm [shape: bf16[128,256], index: 8, kind: input, shape index: {}]
  %s9 = inlined_call_operand.vmem [shape: bf16[8,256], index: 9, kind: input, shape index: {}]
  %s10 = inlined_call_operand.vmem [shape: f32[1,256], index: 10, kind: input, shape index: {}]
  %s11 = inlined_call_operand.hbm [shape: f32[32,256], index: 11, kind: output, shape index: {}]
  %s12 = sld [smem:[#allocation0]]
  $region85: #{tpu_custom_call.1} parent=0
    _
  %s14 = ssub.s32 1, %s12
  %s15 = scalar_select 0, %s14, %s12
  $region1: #{tpu_custom_call.1} parent=0
    #allocation3 [shape = 'u8[65536]{0}', space=vmem, size = 0x10000, scoped, tag = 'input window, operand 8']
    #allocation4 [shape = 's32[2]{0}', space=sflag, size = 0x8, scoped, tag = 'scoped memory for tpu_custom_call.1']
    #allocation5 [shape = 's32[2]{0}', space=sflag, size = 0x8, scoped, tag = 'scoped memory for tpu_custom_call.1']
    #allocation6 [shape = 'u8[16384]{0}', space=vmem, size = 0x4000, scoped, tag = 'output window, operand 0']
    %16 = vsyncpa [#allocation4], 0
    %s17 = scalar_lea.sflag [#allocation4], 1
    %18 = vsyncpa %s17, 0
    %19 = vsyncpa [#allocation5], 0
    %s20 = scalar_lea.sflag [#allocation5], 1
    %21 = vsyncpa %s20, 0
    loop: start=0, step=1, limit=6
    $region2: #{tpu_custom_call.1} parent=1 // loop_pre_header
      _
    $region3: #{tpu_custom_call.1} parent=1 // loop_header
      %s23 = sphi 0, %s27
      %p24 = scmp.ge.s32.totalorder %s23, 6
      %s30 = sphi 0, %s42
      %s31 = sphi 0, %s38
      %s32 = sphi 0, %s30
      %s33 = sphi 0, %s31
      %s34 = sphi 0, %s32
      %s35 = sphi 0, %s33
      %s45 = sphi 0, %s47
      %s48 = sphi 0, %s45
      %s49 = sphi 0, %s48
      %s65 = sphi 0, %s49
      %s71 = sphi 0, %s73
      %s74 = sphi 0, %s71
      %s75 = sphi 0, %s74
      %s91 = sphi 0, %s75
      %s95 = sphi 0, %s95
      %s97 = sphi 0, %s95
      %s98 = sphi 0, %s97
      %s112 = sphi 0, %s98
      %s116 = sphi 0, %s116
      %s118 = sphi 0, %s116
      %s119 = sphi 0, %s118
      %s133 = sphi 0, %s119
      %s137 = sphi 0, %s137
      %s139 = sphi 0, %s137
      %s140 = sphi 0, %s139
      %s154 = sphi 0, %s140
      %s158 = sphi 0, %s158
      %s160 = sphi 0, %s158
      %s161 = sphi 0, %s160
      %s175 = sphi 0, %s161
      %s179 = sphi 0, %s179
      %s181 = sphi 0, %s179
      %s182 = sphi 0, %s181
      %s196 = sphi 0, %s182
      %s200 = sphi 0, %s200
      %s202 = sphi 0, %s200
      %s203 = sphi 0, %s202
      %s217 = sphi 0, %s203
      %s223 = sphi 0, %s225
      %s226 = sphi 0, %s223
      %s227 = sphi 0, %s226
      %s243 = sphi 0, %s227
      %s249 = sphi 0, %s251
      %s252 = sphi 0, %s249
      %s253 = sphi 0, %s252
      %s269 = sphi 0, %s253
      %s275 = sphi 0, %s277
      %s278 = sphi 0, %s275
      %s279 = sphi 0, %s278
      %s295 = sphi 0, %s279
      %s303 = sphi 0, %s305
      %s306 = sphi 0, %s303
      %s307 = sphi 0, %s306
      %s323 = sphi 0, %s307
    $region4: #{tpu_custom_call.1} parent=1 // loop_header_branch
      %26 = sbr.rel (%p24) target = $region8
    $region5: #{tpu_custom_call.1} parent=1 // loop_body
      %s28 = ssub.s32 %s23, 1
      %s29 = ssub.s32 %s23, 2
      %s36 = sadd.s32 1, %s31
      %p37 = scmp.ge.s32.totalorder %s36, 2
      %s38 = scalar_select %p37, 0, %s36
      %s39 = sadd.s32 1, %s30
      %s40 = scalar_select %p37, %s39, %s30
      %p41 = scmp.ge.s32.totalorder %s40, 2
      %s42 = scalar_select %p41, 0, %s40
      %s43 = ssub.s32 %s30, %s42
      %p44 = scmp.eq.s32.totalorder %s43, 0
      %s46 = sadd.s32 %s45, 1
      %s47 = scalar_select %p44, %s45, %s46
      %p50 = pneg %p44
      %p51 = scmp.eq.s32.totalorder %s23, 3
      %p52 = por %p50, %p51
      %p53 = scmp.ne.s32.totalorder %s45, %s48
      %p54 = scmp.eq.s32.totalorder %s23, 0
      %p55 = por %p53, %p54
      %p56 = scmp.ne.s32.totalorder %s45, %s48
      %p57 = scmp.eq.s32.totalorder %s28, 3
      %p58 = por %p56, %p57
      %p59 = scmp.ne.s32.totalorder %s48, %s49
      %p60 = scmp.eq.s32.totalorder %s28, 0
      %p61 = por %p59, %p60
      %p62 = scmp.ne.s32.totalorder %s48, %s49
      %p63 = scmp.eq.s32.totalorder %s29, 3
      %p64 = por %p62, %p63
      %p66 = scmp.ne.s32.totalorder %s49, %s65
      %p67 = scmp.eq.s32.totalorder %s29, 0
      %p68 = por %p66, %p67
      %s69 = ssub.s32 %s30, %s42
      %p70 = scmp.eq.s32.totalorder %s69, 0
      %s72 = sadd.s32 %s71, 1
      %s73 = scalar_select %p70, %s71, %s72
      %p76 = pneg %p70
      %p77 = scmp.eq.s32.totalorder %s23, 3
      %p78 = por %p76, %p77
      %p79 = scmp.ne.s32.totalorder %s71, %s74
      %p80 = scmp.eq.s32.totalorder %s23, 0
      %p81 = por %p79, %p80
      %p82 = scmp.ne.s32.totalorder %s71, %s74
      %p83 = scmp.eq.s32.totalorder %s28, 3
      %p84 = por %p82, %p83
      %p85 = scmp.ne.s32.totalorder %s74, %s75
      %p86 = scmp.eq.s32.totalorder %s28, 0
      %p87 = por %p85, %p86
      %p88 = scmp.ne.s32.totalorder %s74, %s75
      %p89 = scmp.eq.s32.totalorder %s29, 3
      %p90 = por %p88, %p89
      %p92 = scmp.ne.s32.totalorder %s75, %s91
      %p93 = scmp.eq.s32.totalorder %s29, 0
      %p94 = por %p92, %p93
      %s96 = sadd.s32 %s95, 1
      %p99 = scmp.eq.s32.totalorder %s23, 3
      %p100 = scmp.ne.s32.totalorder %s95, %s97
      %p101 = scmp.eq.s32.totalorder %s23, 0
      %p102 = por %p100, %p101
      %p103 = scmp.ne.s32.totalorder %s95, %s97
      %p104 = scmp.eq.s32.totalorder %s28, 3
      %p105 = por %p103, %p104
      %p106 = scmp.ne.s32.totalorder %s97, %s98
      %p107 = scmp.eq.s32.totalorder %s28, 0
      %p108 = por %p106, %p107
      %p109 = scmp.ne.s32.totalorder %s97, %s98
      %p110 = scmp.eq.s32.totalorder %s29, 3
      %p111 = por %p109, %p110
      %p113 = scmp.ne.s32.totalorder %s98, %s112
      %p114 = scmp.eq.s32.totalorder %s29, 0
      %p115 = por %p113, %p114
      %s117 = sadd.s32 %s116, 1
      %p120 = scmp.eq.s32.totalorder %s23, 3
      %p121 = scmp.ne.s32.totalorder %s116, %s118
      %p122 = scmp.eq.s32.totalorder %s23, 0
      %p123 = por %p121, %p122
      %p124 = scmp.ne.s32.totalorder %s116, %s118
      %p125 = scmp.eq.s32.totalorder %s28, 3
      %p126 = por %p124, %p125
      %p127 = scmp.ne.s32.totalorder %s118, %s119
      %p128 = scmp.eq.s32.totalorder %s28, 0
      %p129 = por %p127, %p128
      %p130 = scmp.ne.s32.totalorder %s118, %s119
      %p131 = scmp.eq.s32.totalorder %s29, 3
      %p132 = por %p130, %p131
      %p134 = scmp.ne.s32.totalorder %s119, %s133
      %p135 = scmp.eq.s32.totalorder %s29, 0
      %p136 = por %p134, %p135
      %s138 = sadd.s32 %s137, 1
      %p141 = scmp.eq.s32.totalorder %s23, 3
      %p142 = scmp.ne.s32.totalorder %s137, %s139
      %p143 = scmp.eq.s32.totalorder %s23, 0
      %p144 = por %p142, %p143
      %p145 = scmp.ne.s32.totalorder %s137, %s139
      %p146 = scmp.eq.s32.totalorder %s28, 3
      %p147 = por %p145, %p146
      %p148 = scmp.ne.s32.totalorder %s139, %s140
      %p149 = scmp.eq.s32.totalorder %s28, 0
      %p150 = por %p148, %p149
      %p151 = scmp.ne.s32.totalorder %s139, %s140
      %p152 = scmp.eq.s32.totalorder %s29, 3
      %p153 = por %p151, %p152
      %p155 = scmp.ne.s32.totalorder %s140, %s154
      %p156 = scmp.eq.s32.totalorder %s29, 0
      %p157 = por %p155, %p156
      %s159 = sadd.s32 %s158, 1
      %p162 = scmp.eq.s32.totalorder %s23, 3
      %p163 = scmp.ne.s32.totalorder %s158, %s160
      %p164 = scmp.eq.s32.totalorder %s23, 0
      %p165 = por %p163, %p164
      %p166 = scmp.ne.s32.totalorder %s158, %s160
      %p167 = scmp.eq.s32.totalorder %s28, 3
      %p168 = por %p166, %p167
      %p169 = scmp.ne.s32.totalorder %s160, %s161
      %p170 = scmp.eq.s32.totalorder %s28, 0
      %p171 = por %p169, %p170
      %p172 = scmp.ne.s32.totalorder %s160, %s161
      %p173 = scmp.eq.s32.totalorder %s29, 3
      %p174 = por %p172, %p173
      %p176 = scmp.ne.s32.totalorder %s161, %s175
      %p177 = scmp.eq.s32.totalorder %s29, 0
      %p178 = por %p176, %p177
      %s180 = sadd.s32 %s179, 1
      %p183 = scmp.eq.s32.totalorder %s23, 3
      %p184 = scmp.ne.s32.totalorder %s179, %s181
      %p185 = scmp.eq.s32.totalorder %s23, 0
      %p186 = por %p184, %p185
      %p187 = scmp.ne.s32.totalorder %s179, %s181
      %p188 = scmp.eq.s32.totalorder %s28, 3
      %p189 = por %p187, %p188
      %p190 = scmp.ne.s32.totalorder %s181, %s182
      %p191 = scmp.eq.s32.totalorder %s28, 0
      %p192 = por %p190, %p191
      %p193 = scmp.ne.s32.totalorder %s181, %s182
      %p194 = scmp.eq.s32.totalorder %s29, 3
      %p195 = por %p193, %p194
      %p197 = scmp.ne.s32.totalorder %s182, %s196
      %p198 = scmp.eq.s32.totalorder %s29, 0
      %p199 = por %p197, %p198
      %s201 = sadd.s32 %s200, 1
      %p204 = scmp.eq.s32.totalorder %s23, 3
      %p205 = scmp.ne.s32.totalorder %s200, %s202
      %p206 = scmp.eq.s32.totalorder %s23, 0
      %p207 = por %p205, %p206
      %p208 = scmp.ne.s32.totalorder %s200, %s202
      %p209 = scmp.eq.s32.totalorder %s28, 3
      %p210 = por %p208, %p209
      %p211 = scmp.ne.s32.totalorder %s202, %s203
      %p212 = scmp.eq.s32.totalorder %s28, 0
      %p213 = por %p211, %p212
      %p214 = scmp.ne.s32.totalorder %s202, %s203
      %p215 = scmp.eq.s32.totalorder %s29, 3
      %p216 = por %p214, %p215
      %p218 = scmp.ne.s32.totalorder %s203, %s217
      %p219 = scmp.eq.s32.totalorder %s29, 0
      %p220 = por %p218, %p219
      %s221 = ssub.s32 %s31, %s38
      %p222 = scmp.eq.s32.totalorder %s221, 0
      %s224 = sadd.s32 %s223, 1
      %s225 = scalar_select %p222, %s223, %s224
      %p228 = pneg %p222
      %p229 = scmp.eq.s32.totalorder %s23, 3
      %p230 = por %p228, %p229
      %p231 = scmp.ne.s32.totalorder %s223, %s226
      %p232 = scmp.eq.s32.totalorder %s23, 0
      %p233 = por %p231, %p232
      %p234 = scmp.ne.s32.totalorder %s223, %s226
      %p235 = scmp.eq.s32.totalorder %s28, 3
      %p236 = por %p234, %p235
      %p237 = scmp.ne.s32.totalorder %s226, %s227
      %p238 = scmp.eq.s32.totalorder %s28, 0
      %p239 = por %p237, %p238
      %p240 = scmp.ne.s32.totalorder %s226, %s227
      %p241 = scmp.eq.s32.totalorder %s29, 3
      %p242 = por %p240, %p241
      %p244 = scmp.ne.s32.totalorder %s227, %s243
      %p245 = scmp.eq.s32.totalorder %s29, 0
      %p246 = por %p244, %p245
      %s247 = ssub.s32 %s31, %s38
      %p248 = scmp.eq.s32.totalorder %s247, 0
      %s250 = sadd.s32 %s249, 1
      %s251 = scalar_select %p248, %s249, %s250
      %p254 = pneg %p248
      %p255 = scmp.eq.s32.totalorder %s23, 3
      %p256 = por %p254, %p255
      %p257 = scmp.ne.s32.totalorder %s249, %s252
      %p258 = scmp.eq.s32.totalorder %s23, 0
      %p259 = por %p257, %p258
      %p260 = scmp.ne.s32.totalorder %s249, %s252
      %p261 = scmp.eq.s32.totalorder %s28, 3
      %p262 = por %p260, %p261
      %p263 = scmp.ne.s32.totalorder %s252, %s253
      %p264 = scmp.eq.s32.totalorder %s28, 0
      %p265 = por %p263, %p264
      %p266 = scmp.ne.s32.totalorder %s252, %s253
      %p267 = scmp.eq.s32.totalorder %s29, 3
      %p268 = por %p266, %p267
      %p270 = scmp.ne.s32.totalorder %s253, %s269
      %p271 = scmp.eq.s32.totalorder %s29, 0
      %p272 = por %p270, %p271
      %s273 = ssub.s32 %s31, %s38
      %p274 = scmp.eq.s32.totalorder %s273, 0
      %s276 = sadd.s32 %s275, 1
      %s277 = scalar_select %p274, %s275, %s276
      %p280 = pneg %p274
      %p281 = scmp.eq.s32.totalorder %s23, 3
      %p282 = por %p280, %p281
      %p283 = scmp.ne.s32.totalorder %s275, %s278
      %p284 = scmp.eq.s32.totalorder %s23, 0
      %p285 = por %p283, %p284
      %p286 = scmp.ne.s32.totalorder %s275, %s278
      %p287 = scmp.eq.s32.totalorder %s28, 3
      %p288 = por %p286, %p287
      %p289 = scmp.ne.s32.totalorder %s278, %s279
      %p290 = scmp.eq.s32.totalorder %s28, 0
      %p291 = por %p289, %p290
      %p292 = scmp.ne.s32.totalorder %s278, %s279
      %p293 = scmp.eq.s32.totalorder %s29, 3
      %p294 = por %p292, %p293
      %p296 = scmp.ne.s32.totalorder %s279, %s295
      %p297 = scmp.eq.s32.totalorder %s29, 0
      %p298 = por %p296, %p297
      %s299 = ssub.s32 %s30, %s42
      %s300 = ssub.s32 %s31, %s38
      %s301 = sor.u32 %s299, %s300
      %p302 = scmp.eq.s32.totalorder %s301, 0
      %s304 = sadd.s32 %s303, 1
      %s305 = scalar_select %p302, %s303, %s304
      %p308 = pneg %p302
      %p309 = scmp.eq.s32.totalorder %s23, 3
      %p310 = por %p308, %p309
      %p311 = scmp.ne.s32.totalorder %s303, %s306
      %p312 = scmp.eq.s32.totalorder %s23, 0
      %p313 = por %p311, %p312
      %p314 = scmp.ne.s32.totalorder %s303, %s306
      %p315 = scmp.eq.s32.totalorder %s28, 3
      %p316 = por %p314, %p315
      %p317 = scmp.ne.s32.totalorder %s306, %s307
      %p318 = scmp.eq.s32.totalorder %s28, 0
      %p319 = por %p317, %p318
      %p320 = scmp.ne.s32.totalorder %s306, %s307
      %p321 = scmp.eq.s32.totalorder %s29, 3
      %p322 = por %p320, %p321
      %p324 = scmp.ne.s32.totalorder %s307, %s323
      %p325 = scmp.eq.s32.totalorder %s29, 0
      %p326 = por %p324, %p325
      %p327 = scmp.le.s32.totalorder 1, %s23
      %p328 = scmp.lt.s32.totalorder %s23, 5
      %p329 = pnand %p327, %p328
      %p330 = pneg %p329
      // Predicated region
      $region9: #{tpu_custom_call.1} parent=5 // pred_check
        _
      $region10: #{tpu_custom_call.1} parent=5 // pred_check_branch
        %332 = sbr.rel (%p329) target = $region12
      $region11: #{tpu_custom_call.1} parent=5 // pred_region
        %s333 = ssub.s32 %s23, 1
        // Predicated region
        $region13: #{tpu_custom_call.1} parent=11 // pred_check
          %p334 = pneg %p108
        $region14: #{tpu_custom_call.1} parent=11 // pred_check_branch
          %336 = sbr.rel (%p334) target = $region16
        $region15: #{tpu_custom_call.1} parent=11 // pred_region
          _
        $region16: #{tpu_custom_call.1} parent=11 // pred_fallthru
          _
        // Predicated region
        $region17: #{tpu_custom_call.1} parent=11 // pred_check
          %p337 = pneg %p129
        $region18: #{tpu_custom_call.1} parent=11 // pred_check_branch
          %339 = sbr.rel (%p337) target = $region20
        $region19: #{tpu_custom_call.1} parent=11 // pred_region
          _
        $region20: #{tpu_custom_call.1} parent=11 // pred_fallthru
          _
        // Predicated region
        $region21: #{tpu_custom_call.1} parent=11 // pred_check
          %p340 = pneg %p150
        $region22: #{tpu_custom_call.1} parent=11 // pred_check_branch
          %342 = sbr.rel (%p340) target = $region24
        $region23: #{tpu_custom_call.1} parent=11 // pred_region
          _
        $region24: #{tpu_custom_call.1} parent=11 // pred_fallthru
          _
        // Predicated region
        $region25: #{tpu_custom_call.1} parent=11 // pred_check
          %p343 = pneg %p171
        $region26: #{tpu_custom_call.1} parent=11 // pred_check_branch
          %345 = sbr.rel (%p343) target = $region28
        $region27: #{tpu_custom_call.1} parent=11 // pred_region
          _
        $region28: #{tpu_custom_call.1} parent=11 // pred_fallthru
          _
        // Predicated region
        $region29: #{tpu_custom_call.1} parent=11 // pred_check
          %p346 = pneg %p192
        $region30: #{tpu_custom_call.1} parent=11 // pred_check_branch
          %348 = sbr.rel (%p346) target = $region32
        $region31: #{tpu_custom_call.1} parent=11 // pred_region
          _
        $region32: #{tpu_custom_call.1} parent=11 // pred_fallthru
          _
        // Predicated region
        $region33: #{tpu_custom_call.1} parent=11 // pred_check
          %p349 = pneg %p213
        $region34: #{tpu_custom_call.1} parent=11 // pred_check_branch
          %351 = sbr.rel (%p349) target = $region36
        $region35: #{tpu_custom_call.1} parent=11 // pred_region
          _
        $region36: #{tpu_custom_call.1} parent=11 // pred_fallthru
          _
      $region12: #{tpu_custom_call.1} parent=5 // pred_fallthru
        _
      %p352 = scmp.lt.s32.totalorder %s23, 4
      // Predicated region
      $region37: #{tpu_custom_call.1} parent=5 // pred_check
        %p353 = pneg %p352
      $region38: #{tpu_custom_call.1} parent=5 // pred_check_branch
        %355 = sbr.rel (%p353) target = $region40
      $region39: #{tpu_custom_call.1} parent=5 // pred_region
        // Predicated region
        $region41: #{tpu_custom_call.1} parent=39 // pred_check
          %p356 = pneg %p55
        $region42: #{tpu_custom_call.1} parent=39 // pred_check_branch
          %358 = sbr.rel (%p356) target = $region44
        $region43: #{tpu_custom_call.1} parent=39 // pred_region
          %s359 = smul.u32 2, %s30
          %p360 = scmp.lt.s32.totalorder %s359, 3
          %s361 = scalar_select %p360, %s359, 3
          %s362 = smul.addr %s361, 8
          %s363 = scalar_lea.vmem %s0, %s362
          %s364 = smul.u32 2, %s30
        $region44: #{tpu_custom_call.1} parent=39 // pred_fallthru
          _
        // Predicated region
        $region45: #{tpu_custom_call.1} parent=39 // pred_check
          %p365 = pneg %p81
        $region46: #{tpu_custom_call.1} parent=39 // pred_check_branch
          %367 = sbr.rel (%p365) target = $region48
        $region47: #{tpu_custom_call.1} parent=39 // pred_region
          %s368 = smul.u32 2, %s30
          %p369 = scmp.lt.s32.totalorder %s368, 3
          %s370 = scalar_select %p369, %s368, 3
          %s371 = smul.addr %s370, 8
          %s372 = scalar_lea.vmem %s1, %s371
          %s373 = smul.u32 2, %s30
        $region48: #{tpu_custom_call.1} parent=39 // pred_fallthru
          _
        // Predicated region
        $region49: #{tpu_custom_call.1} parent=39 // pred_check
          %p374 = pneg %p233
        $region50: #{tpu_custom_call.1} parent=39 // pred_check_branch
          %376 = sbr.rel (%p374) target = $region52
        $region51: #{tpu_custom_call.1} parent=39 // pred_region
          %s377 = sand.u32 %s223, 1
          %s378 = scalar_lea.sflag [#allocation4], %s377
          %s379 = sand.u32 %s223, 1
          %s380 = smul.addr %s379, 64
          %s381 = scalar_lea.vmem [#allocation3], %s380
          %383 = vsyncadd %s378, 0
          %s384 = smul.addr %s31, 4
          %s385 = scalar_lea.hbm %s8, %s384
          %s386 = sshll.u32 %s385, 4
          %s387 = int_to_ptr.hbm [resolvable:$true] %s386
          %s388 = sshll.u32 %s381, 4
          %s389 = int_to_ptr.vmem [resolvable:$true] %s388
          %394 = dma.hbm_to_vmem [thread:$0]  %s387, 1024, %s389, %s378, 128, 64, 4
        $region52: #{tpu_custom_call.1} parent=39 // pred_fallthru
          _
        // Predicated region
        $region53: #{tpu_custom_call.1} parent=39 // pred_check
          %p395 = pneg %p259
        $region54: #{tpu_custom_call.1} parent=39 // pred_check_branch
          %397 = sbr.rel (%p395) target = $region56
        $region55: #{tpu_custom_call.1} parent=39 // pred_region
          %p398 = scmp.lt.s32.totalorder %s31, 1
          %s399 = scalar_select %p398, %s31, 1
          %s400 = smul.addr %s399, 4
          %s401 = scalar_lea.vmem %s9, %s400
        $region56: #{tpu_custom_call.1} parent=39 // pred_fallthru
          _
        // Predicated region
        $region57: #{tpu_custom_call.1} parent=39 // pred_check
          %p402 = pneg %p285
        $region58: #{tpu_custom_call.1} parent=39 // pred_check_branch
          %404 = sbr.rel (%p402) target = $region60
        $region59: #{tpu_custom_call.1} parent=39 // pred_region
          %p405 = scmp.lt.s32.totalorder %s31, 1
          %s406 = scalar_select %p405, %s31, 1
          %s407 = scalar_lea.vmem %s10, %s406
        $region60: #{tpu_custom_call.1} parent=39 // pred_fallthru
          _
      $region40: #{tpu_custom_call.1} parent=5 // pred_fallthru
        _
      %p408 = scmp.le.s32.totalorder 1, %s23
      %p409 = scmp.lt.s32.totalorder %s23, 5
      %p410 = pnand %p408, %p409
      %p411 = pneg %p410
      // Predicated region
      $region61: #{tpu_custom_call.1} parent=5 // pred_check
        _
      $region62: #{tpu_custom_call.1} parent=5 // pred_check_branch
        %413 = sbr.rel (%p410) target = $region64
      $region63: #{tpu_custom_call.1} parent=5 // pred_region
        %s414 = ssub.s32 %s23, 1
        %s415 = sand.u32 %s226, 1
        %s416 = scalar_lea.sflag [#allocation4], %s415
        %s417 = sand.u32 %s226, 1
        %s418 = smul.addr %s417, 64
        %s419 = scalar_lea.vmem [#allocation3], %s418
        // Predicated region
        $region65: #{tpu_custom_call.1} parent=63 // pred_check
          %p420 = pneg %p239
        $region66: #{tpu_custom_call.1} parent=63 // pred_check_branch
          %422 = sbr.rel (%p420) target = $region68
        $region67: #{tpu_custom_call.1} parent=63 // pred_region
          %424 = dma.done %s416, 1024
        $region68: #{tpu_custom_call.1} parent=63 // pred_fallthru
          _
        %s425 = smul.u32 2, %s32
        %p426 = scmp.lt.s32.totalorder %s425, 3
        %s427 = scalar_select %p426, %s425, 3
        %s428 = smul.addr %s427, 8
        %s429 = scalar_lea.vmem %s0, %s428
        %p430 = pneg %p61
        %p431 = pneg %p58
        %s432 = smul.u32 2, %s32
        %p433 = scmp.lt.s32.totalorder %s432, 3
        %s434 = scalar_select %p433, %s432, 3
        %s435 = smul.addr %s434, 8
        %s436 = scalar_lea.vmem %s1, %s435
        %p437 = pneg %p87
        %p438 = pneg %p84
        %p439 = pneg %p108
        %p440 = pneg %p105
        %p441 = pneg %p129
        %p442 = pneg %p126
        %p443 = pneg %p150
        %p444 = pneg %p147
        %p445 = pneg %p171
        %p446 = pneg %p168
        %p447 = pneg %p192
        %p448 = pneg %p189
        %p449 = pneg %p213
        %p450 = pneg %p210
        %s451 = sand.u32 %s226, 1
        %s452 = scalar_lea.sflag [#allocation4], %s451
        %s453 = sand.u32 %s226, 1
        %s454 = smul.addr %s453, 64
        %s455 = scalar_lea.vmem [#allocation3], %s454
        %p456 = pneg %p239
        %p457 = pneg %p236
        %p458 = scmp.lt.s32.totalorder %s33, 1
        %s459 = scalar_select %p458, %s33, 1
        %s460 = smul.addr %s459, 4
        %s461 = scalar_lea.vmem %s9, %s460
        %p462 = pneg %p265
        %p463 = pneg %p262
        %p464 = scmp.lt.s32.totalorder %s33, 1
        %s465 = scalar_select %p464, %s33, 1
        %s466 = scalar_lea.vmem %s10, %s465
        %p467 = pneg %p291
        %p468 = pneg %p288
        %p469 = pneg %p319
        %p470 = pneg %p316
        %s471 = sand.u32 %s306, 1
        %s472 = scalar_lea.sflag [#allocation5], %s471
        %s473 = sand.u32 %s306, 1
        %s474 = smul.addr %s473, 16
        %s475 = scalar_lea.vmem [#allocation6], %s474
        %s476 = smul.u32 2, %s32
        %p477 = scmp.lt.s32.totalorder %s476, 3
        %s478 = scalar_select %p477, %s476, 3
        %s479 = smul.addr %s478, 8
        %s480 = scalar_lea.vmem %s0, %s479
        %s481 = smul.u32 2, %s32
        %s482 = smul.u32 2, %s32
        %p483 = scmp.lt.s32.totalorder %s482, 3
        %s484 = scalar_select %p483, %s482, 3
        %s485 = smul.addr %s484, 8
        %s486 = scalar_lea.vmem %s1, %s485
        %s487 = smul.u32 2, %s32
        %p488 = scmp.lt.s32.totalorder %s33, 1
        %s489 = scalar_select %p488, %s33, 1
        %s490 = smul.addr %s489, 4
        %s491 = scalar_lea.vmem %s9, %s490
        %p492 = scmp.lt.s32.totalorder %s33, 1
        %s493 = scalar_select %p492, %s33, 1
        %s494 = scalar_lea.vmem %s10, %s493
        %s495 = smul.u32 2, %s32
        %p497 = scmp.eq.s32.totalorder %s33, 0
        // Predicated region
        $region69: #{tpu_custom_call.1} parent=63 // pred_check
          %p498 = pneg %p497
        $region70: #{tpu_custom_call.1} parent=63 // pred_check_branch
          %500 = sbr.rel (%p498) target = $region72
        $region71: #{tpu_custom_call.1} parent=63 // pred_region
          %v501 = vld [vmem:[%s480] sm:$0xff]
          %v502 = vld [vmem:[%s480 + $0x8] sm:$0xff]
          %v503 = vpack.c.bf16 %v502, %v501
          %v504 = vld [vmem:[%s486] sm:$0xff]
          %v505 = vld [vmem:[%s486 + $0x8] sm:$0xff]
          %v506 = vpack.c.bf16 %v505, %v504
          %v507 = vld [vmem:[%s2] sm:$0xf]
          %v508 = vld [vmem:[%s2 + $0x4] sm:$0xf]
          %v509 = vld [vmem:[%s3] sm:$0xf]
          %vm510 = vcmask 64512
          %v512 = vsel %vm510, %v506, 0
          %vm514 = vcmask 1043456
          %v516 = vsel %vm514, %v509, 0
          %518 = vmatpush.bf16.msra.mxu0 0
          %519 = vmatpush.bf16.msra.mxu0 0
          %520 = vmatpush.bf16.msra.mxu0 0
          %521 = vmatpush.bf16.msra.mxu0 0
          %522 = vmatpush.bf16.msra.mxu0 0
          %523 = vmatpush.bf16.msra.mxu0 0
          %524 = vmatpush.bf16.msra.mxu0 0
          %525 = vmatpush.bf16.msra.mxu0 %v516
          %526 = vmatmul.bf16.gmra.mxu0 %v512
          %v527 = vpop.f32.mrf.mxu0
          %v528 = vadd.f32 0.0, %v527
          %v529 = vpop.f32.mrf.mxu0
          %v530 = vadd.f32 0.0, %v529
          %531 = vdwg.mxu0
          %v534 = vunpack.c.l.b16 %v507
          %v535 = vunpack.c.l.b16 %v508
          %v536 = vpack.c.b16 %v535, %v534
          %vm538 = vcmask 130048
          %v540 = vsel %vm538, %v503, 0
          %542 = vmatpush.bf16.msra.mxu0 0
          %543 = vmatpush.bf16.msra.mxu0 0
          %544 = vmatpush.bf16.msra.mxu0 0
          %545 = vmatpush.bf16.msra.mxu0 0
          %546 = vmatpush.bf16.msra.mxu0 0
          %547 = vmatpush.bf16.msra.mxu0 0
          %548 = vmatpush.bf16.msra.mxu0 0
          %549 = vmatpush.bf16.msra.mxu0 %v536
          %550 = vmatmul.bf16.gmra.mxu0 %v540
          %v551 = vpop.f32.mrf.mxu0
          %v552 = vadd.f32 %v528, %v551
          %v553 = vpop.f32.mrf.mxu0
          %v554 = vadd.f32 %v530, %v553
          %555 = vdwg.mxu0
          %v556 = vld [vmem:[%s4] sm:$0x1]
          %v558 = vperm.slane %v556, 0
          %v560 = vadd.f32 %v552, %v558
          %v561 = vadd.f32 %v554, %v558
          %v562 = vmax.f32 %v560, 0.0
          %v563 = vmax.f32 %v561, 0.0
          %v564 = vpack.c.bf16 %v563, %v562
          %v565 = vld [vmem:[%s5] sm:$0xf]
          %v566 = vld [vmem:[%s5 + $0x4] sm:$0xf]
          %v567 = vld [vmem:[%s5 + $0x8] sm:$0xf]
          %v568 = vld [vmem:[%s5 + $0xc] sm:$0xf]
          %v569 = vld [vmem:[%s5 + $0x10] sm:$0xf]
          %v570 = vld [vmem:[%s5 + $0x14] sm:$0xf]
          %v571 = vld [vmem:[%s5 + $0x18] sm:$0xf]
          %v572 = vld [vmem:[%s5 + $0x1c] sm:$0xf]
          %v573 = vld [vmem:[%s5 + $0x20] sm:$0xf]
          %v574 = vld [vmem:[%s5 + $0x24] sm:$0xf]
          %v575 = vld [vmem:[%s5 + $0x28] sm:$0xf]
          %v576 = vld [vmem:[%s5 + $0x2c] sm:$0xf]
          %v577 = vld [vmem:[%s5 + $0x30] sm:$0xf]
          %v578 = vld [vmem:[%s5 + $0x34] sm:$0xf]
          %v579 = vld [vmem:[%s5 + $0x38] sm:$0xf]
          %v580 = vld [vmem:[%s5 + $0x3c] sm:$0xf]
          %v581 = vld [vmem:[%s6] sm:$0xf]
          %v583 = vsel %vm514, %v581, 0
          %585 = vmatpush.bf16.msra.mxu0 0
          %586 = vmatpush.bf16.msra.mxu0 0
          %587 = vmatpush.bf16.msra.mxu0 0
          %588 = vmatpush.bf16.msra.mxu0 0
          %589 = vmatpush.bf16.msra.mxu0 0
          %590 = vmatpush.bf16.msra.mxu0 0
          %591 = vmatpush.bf16.msra.mxu0 0
          %592 = vmatpush.bf16.msra.mxu0 %v583
          %593 = vmatmul.bf16.gmra.mxu0 %v512
          %v594 = vpop.f32.mrf.mxu0
          %v595 = vadd.f32 0.0, %v594
          %v596 = vpop.f32.mrf.mxu0
          %v597 = vadd.f32 0.0, %v596
          %598 = vdwg.mxu0
          %v615 = vunpack.c.l.b16 %v565
          %v616 = vunpack.c.l.b16 %v566
          %v617 = vunpack.c.l.b16 %v567
          %v618 = vunpack.c.l.b16 %v568
          %v619 = vunpack.c.l.b16 %v569
          %v620 = vunpack.c.l.b16 %v570
          %v621 = vunpack.c.l.b16 %v571
          %v622 = vunpack.c.l.b16 %v572
          %v623 = vunpack.c.l.b16 %v573
          %v624 = vunpack.c.l.b16 %v574
          %v625 = vunpack.c.l.b16 %v575
          %v626 = vunpack.c.l.b16 %v576
          %v627 = vunpack.c.l.b16 %v577
          %v628 = vunpack.c.l.b16 %v578
          %v629 = vunpack.c.l.b16 %v579
          %v630 = vunpack.c.l.b16 %v580
          %v631 = vpack.c.b16 %v616, %v615
          %v632 = vpack.c.b16 %v618, %v617
          %v633 = vpack.c.b16 %v620, %v619
          %v634 = vpack.c.b16 %v622, %v621
          %v635 = vpack.c.b16 %v624, %v623
          %v636 = vpack.c.b16 %v626, %v625
          %v637 = vpack.c.b16 %v628, %v627
          %v638 = vpack.c.b16 %v630, %v629
          %647 = vmatpush.bf16.msra.mxu0 %v638
          %648 = vmatpush.bf16.msra.mxu0 %v637
          %649 = vmatpush.bf16.msra.mxu0 %v636
          %650 = vmatpush.bf16.msra.mxu0 %v635
          %651 = vmatpush.bf16.msra.mxu0 %v634
          %652 = vmatpush.bf16.msra.mxu0 %v633
          %653 = vmatpush.bf16.msra.mxu0 %v632
          %654 = vmatpush.bf16.msra.mxu0 %v631
          %655 = vmatmul.bf16.gmra.mxu0 %v564
          %v656 = vpop.f32.mrf.mxu0
          %v657 = vadd.f32 %v595, %v656
          %v658 = vpop.f32.mrf.mxu0
          %v659 = vadd.f32 %v597, %v658
          %660 = vdwg.mxu0
          %v661 = vld [vmem:[%s7] sm:$0x1]
          %v663 = vperm.slane %v661, 0
          %v665 = vadd.f32 %v657, %v663
          %v666 = vadd.f32 %v659, %v663
          %v667 = vmax.f32 %v665, 0.0
          %v668 = vmax.f32 %v666, 0.0
          %v669 = vpack.c.bf16 %v667, %v667
          %v670 = vpack.c.bf16 %v668, %v668
          %v671 = vunpack.c.l.bf16 %v669
          %v672 = vunpack.c.l.bf16 %v670
          %673 = vst [vmem:[#allocation2] sm:$0xff] %v671
          %674 = vst [vmem:[#allocation2 + $0x8] sm:$0xff] %v672
        $region72: #{tpu_custom_call.1} parent=63 // pred_fallthru
          _
        %v675 = vld [vmem:[#allocation2] sm:$0xff]
        %v676 = vld [vmem:[#allocation2 + $0x8] sm:$0xff]
        %v677 = vpack.c.bf16 %v676, %v675
        %v678 = vld [vmem:[%s419] sm:$0xf]
        %v679 = vld [vmem:[%s419 + $0x4] sm:$0xf]
        %v680 = vld [vmem:[%s419 + $0x8] sm:$0xf]
        %v681 = vld [vmem:[%s419 + $0xc] sm:$0xf]
        %v682 = vld [vmem:[%s419 + $0x10] sm:$0xf]
        %v683 = vld [vmem:[%s419 + $0x14] sm:$0xf]
        %v684 = vld [vmem:[%s419 + $0x18] sm:$0xf]
        %v685 = vld [vmem:[%s419 + $0x1c] sm:$0xf]
        %v686 = vld [vmem:[%s419 + $0x20] sm:$0xf]
        %v687 = vld [vmem:[%s419 + $0x24] sm:$0xf]
        %v688 = vld [vmem:[%s419 + $0x28] sm:$0xf]
        %v689 = vld [vmem:[%s419 + $0x2c] sm:$0xf]
        %v690 = vld [vmem:[%s419 + $0x30] sm:$0xf]
        %v691 = vld [vmem:[%s419 + $0x34] sm:$0xf]
        %v692 = vld [vmem:[%s419 + $0x38] sm:$0xf]
        %v693 = vld [vmem:[%s419 + $0x3c] sm:$0xf]
        %v694 = vld [vmem:[%s486] sm:$0xff]
        %v695 = vld [vmem:[%s486 + $0x8] sm:$0xff]
        %v696 = vpack.c.bf16 %v695, %v694
        %v697 = vld [vmem:[%s491] sm:$0xf]
        %vm698 = vcmask 64512
        %v700 = vsel %vm698, %v696, 0
        %vm702 = vcmask 1043456
        %v704 = vsel %vm702, %v697, 0
        %706 = vmatpush.bf16.msra.mxu0 0
        %707 = vmatpush.bf16.msra.mxu0 0
        %708 = vmatpush.bf16.msra.mxu0 0
        %709 = vmatpush.bf16.msra.mxu0 0
        %710 = vmatpush.bf16.msra.mxu0 0
        %711 = vmatpush.bf16.msra.mxu0 0
        %712 = vmatpush.bf16.msra.mxu0 0
        %713 = vmatpush.bf16.msra.mxu0 %v704
        %714 = vmatmul.bf16.gmra.mxu0 %v700
        %v715 = vpop.f32.mrf.mxu0
        %v716 = vadd.f32 0.0, %v715
        %v717 = vpop.f32.mrf.mxu0
        %v718 = vadd.f32 0.0, %v717
        %719 = vdwg.mxu0
        %v736 = vunpack.c.l.b16 %v678
        %v737 = vunpack.c.l.b16 %v679
        %v738 = vunpack.c.l.b16 %v680
        %v739 = vunpack.c.l.b16 %v681
        %v740 = vunpack.c.l.b16 %v682
        %v741 = vunpack.c.l.b16 %v683
        %v742 = vunpack.c.l.b16 %v684
        %v743 = vunpack.c.l.b16 %v685
        %v744 = vunpack.c.l.b16 %v686
        %v745 = vunpack.c.l.b16 %v687
        %v746 = vunpack.c.l.b16 %v688
        %v747 = vunpack.c.l.b16 %v689
        %v748 = vunpack.c.l.b16 %v690
        %v749 = vunpack.c.l.b16 %v691
        %v750 = vunpack.c.l.b16 %v692
        %v751 = vunpack.c.l.b16 %v693
        %v752 = vpack.c.b16 %v737, %v736
        %v753 = vpack.c.b16 %v739, %v738
        %v754 = vpack.c.b16 %v741, %v740
        %v755 = vpack.c.b16 %v743, %v742
        %v756 = vpack.c.b16 %v745, %v744
        %v757 = vpack.c.b16 %v747, %v746
        %v758 = vpack.c.b16 %v749, %v748
        %v759 = vpack.c.b16 %v751, %v750
        %768 = vmatpush.bf16.msra.mxu0 %v759
        %769 = vmatpush.bf16.msra.mxu0 %v758
        %770 = vmatpush.bf16.msra.mxu0 %v757
        %771 = vmatpush.bf16.msra.mxu0 %v756
        %772 = vmatpush.bf16.msra.mxu0 %v755
        %773 = vmatpush.bf16.msra.mxu0 %v754
        %774 = vmatpush.bf16.msra.mxu0 %v753
        %775 = vmatpush.bf16.msra.mxu0 %v752
        %776 = vmatmul.bf16.gmra.mxu0 %v677
        %v777 = vpop.f32.mrf.mxu0
        %v778 = vadd.f32 %v716, %v777
        %v779 = vpop.f32.mrf.mxu0
        %v780 = vadd.f32 %v718, %v779
        %781 = vdwg.mxu0
        %v782 = vld [vmem:[%s494] sm:$0x1]
        %v784 = vperm.slane %v782, 0
        %v786 = vadd.f32 %v778, %v784
        %v787 = vadd.f32 %v780, %v784
        %788 = vst [vmem:[%s475] sm:$0xff] %v786
        %789 = vst [vmem:[%s475 + $0x8] sm:$0xff] %v787
        %s790 = sand.u32 %s306, 1
        %s791 = scalar_lea.sflag [#allocation5], %s790
        %s792 = sand.u32 %s306, 1
        %s793 = smul.addr %s792, 16
        %s794 = scalar_lea.vmem [#allocation6], %s793
        // Predicated region
        $region73: #{tpu_custom_call.1} parent=63 // pred_check
          %p795 = pneg %p316
        $region74: #{tpu_custom_call.1} parent=63 // pred_check_branch
          %797 = sbr.rel (%p795) target = $region76
        $region75: #{tpu_custom_call.1} parent=63 // pred_region
          %s798 = smul.u32 2, %s32
          %800 = vsyncadd %s791, 0
          %s801 = smul.addr %s798, 2
          %s802 = sadd.s32 %s33, %s801
          %s803 = smul.addr %s802, 8
          %s804 = scalar_lea.hbm %s11, %s803
          %s805 = sshll.u32 %s794, 4
          %s806 = int_to_ptr.vmem [resolvable:$true] %s805
          %s807 = sshll.u32 %s804, 4
          %s808 = int_to_ptr.hbm [resolvable:$true] %s807
          %813 = dma.vmem_to_hbm [thread:$0]  %s806, 256, %s808, %s791, 128, 256, 8
        $region76: #{tpu_custom_call.1} parent=63 // pred_fallthru
          _
      $region64: #{tpu_custom_call.1} parent=5 // pred_fallthru
        _
      %p814 = scmp.le.s32.totalorder 2, %s23
      // Predicated region
      $region77: #{tpu_custom_call.1} parent=5 // pred_check
        %p815 = pneg %p814
      $region78: #{tpu_custom_call.1} parent=5 // pred_check_branch
        %817 = sbr.rel (%p815) target = $region80
      $region79: #{tpu_custom_call.1} parent=5 // pred_region
        %s818 = ssub.s32 %s23, 2
        // Predicated region
        $region81: #{tpu_custom_call.1} parent=79 // pred_check
          %p819 = pneg %p322
        $region82: #{tpu_custom_call.1} parent=79 // pred_check_branch
          %821 = sbr.rel (%p819) target = $region84
        $region83: #{tpu_custom_call.1} parent=79 // pred_region
          %s822 = sand.u32 %s307, 1
          %s823 = scalar_lea.sflag [#allocation5], %s822
          %s824 = sand.u32 %s307, 1
          %s825 = smul.addr %s824, 16
          %s826 = scalar_lea.vmem [#allocation6], %s825
          %828 = dma.done %s823, 256
        $region84: #{tpu_custom_call.1} parent=79 // pred_fallthru
          _
      $region80: #{tpu_custom_call.1} parent=5 // pred_fallthru
        _
    $region6: #{tpu_custom_call.1} parent=1 // loop_footer
      %s27 = sadd.s32 1, %s23
    $region7: #{tpu_custom_call.1} parent=1 // loop_footer_branch
      %22 = sbr.rel target = $region3
    $region8: #{tpu_custom_call.1} parent=1 // loop_exit
      _
    %829 = vsyncpa [#allocation4], 1
    %s830 = scalar_lea.sflag [#allocation4], 1
    %831 = vsyncpa %s830, 1
    %832 = vsyncpa [#allocation5], 1
    %s833 = scalar_lea.sflag [#allocation5], 1
    %834 = vsyncpa %s833, 1

// kernel: tpu_custom_call.1
$region0: #{tpu_custom_call.1}
  #allocation0 [shape = 'u32[]', space=smem, size = 0x4, offset = 0x4, fixed_abs, tag = 'smem constant byte address 0x4 - core index']
  #allocation1 [shape = 'u32[72,128]{1,0:T(1,128)}', space=vmem, size = 0x9000, scoped, tag = 'internal scratch']
  #allocation2 [shape = 'f32[16,128]{1,0:T(8,128)}', space=vmem, size = 0x2000, scoped, tag = 'scratch operand']
  %s0 = inlined_call_operand.vmem [shape: f32[32,16], index: 0, kind: input, shape index: {}]
  %s1 = inlined_call_operand.vmem [shape: f32[32,8], index: 1, kind: input, shape index: {}]
  %s2 = inlined_call_operand.vmem [shape: bf16[16,128], index: 2, kind: input, shape index: {}]
  %s3 = inlined_call_operand.vmem [shape: bf16[8,128], index: 3, kind: input, shape index: {}]
  %s4 = inlined_call_operand.vmem [shape: f32[1,128], index: 4, kind: input, shape index: {}]
  %s5 = inlined_call_operand.vmem [shape: bf16[128,128], index: 5, kind: input, shape index: {}]
  %s6 = inlined_call_operand.vmem [shape: bf16[8,128], index: 6, kind: input, shape index: {}]
  %s7 = inlined_call_operand.vmem [shape: f32[1,128], index: 7, kind: input, shape index: {}]
  %s8 = inlined_call_operand.hbm [shape: bf16[128,256], index: 8, kind: input, shape index: {}]
  %s9 = inlined_call_operand.vmem [shape: bf16[8,256], index: 9, kind: input, shape index: {}]
  %s10 = inlined_call_operand.vmem [shape: f32[1,256], index: 10, kind: input, shape index: {}]
  %s11 = inlined_call_operand.hbm [shape: f32[32,256], index: 11, kind: output, shape index: {}]
  %s12 = sld [smem:[#allocation0]]
  $region85: #{tpu_custom_call.1} parent=0
    _
  %s14 = ssub.s32 1, %s12
  %s15 = scalar_select 0, %s14, %s12
  $region1: #{tpu_custom_call.1} parent=0
    #allocation3 [shape = 'u8[65536]{0}', space=vmem, size = 0x10000, scoped, tag = 'input window, operand 8']
    #allocation4 [shape = 's32[2]{0}', space=sflag, size = 0x8, scoped, tag = 'scoped memory for tpu_custom_call.1']
    #allocation5 [shape = 's32[2]{0}', space=sflag, size = 0x8, scoped, tag = 'scoped memory for tpu_custom_call.1']
    #allocation6 [shape = 'u8[16384]{0}', space=vmem, size = 0x4000, scoped, tag = 'output window, operand 0']
    %16 = vsyncpa [#allocation4], 0
    %s17 = scalar_lea.sflag [#allocation4], 1
    %18 = vsyncpa %s17, 0
    %19 = vsyncpa [#allocation5], 0
    %s20 = scalar_lea.sflag [#allocation5], 1
    %21 = vsyncpa %s20, 0
    loop: start=0, step=1, limit=6
    $region2: #{tpu_custom_call.1} parent=1 // loop_pre_header
      _
    $region3: #{tpu_custom_call.1} parent=1 // loop_header
      %s23 = sphi 0, %s27
      %p24 = scmp.ge.s32.totalorder %s23, 6
      %s30 = sphi 0, %s42
      %s31 = sphi 0, %s38
      %s32 = sphi 0, %s30
      %s33 = sphi 0, %s31
      %s34 = sphi 0, %s32
      %s35 = sphi 0, %s33
      %s45 = sphi 0, %s47
      %s48 = sphi 0, %s45
      %s49 = sphi 0, %s48
      %s65 = sphi 0, %s49
      %s71 = sphi 0, %s73
      %s74 = sphi 0, %s71
      %s75 = sphi 0, %s74
      %s91 = sphi 0, %s75
      %s95 = sphi 0, %s95
      %s97 = sphi 0, %s95
      %s98 = sphi 0, %s97
      %s112 = sphi 0, %s98
      %s116 = sphi 0, %s116
      %s118 = sphi 0, %s116
      %s119 = sphi 0, %s118
      %s133 = sphi 0, %s119
      %s137 = sphi 0, %s137
      %s139 = sphi 0, %s137
      %s140 = sphi 0, %s139
      %s154 = sphi 0, %s140
      %s158 = sphi 0, %s158
      %s160 = sphi 0, %s158
      %s161 = sphi 0, %s160
      %s175 = sphi 0, %s161
      %s179 = sphi 0, %s179
      %s181 = sphi 0, %s179
      %s182 = sphi 0, %s181
      %s196 = sphi 0, %s182
      %s200 = sphi 0, %s200
      %s202 = sphi 0, %s200
      %s203 = sphi 0, %s202
      %s217 = sphi 0, %s203
      %s223 = sphi 0, %s225
      %s226 = sphi 0, %s223
      %s227 = sphi 0, %s226
      %s243 = sphi 0, %s227
      %s249 = sphi 0, %s251
      %s252 = sphi 0, %s249
      %s253 = sphi 0, %s252
      %s269 = sphi 0, %s253
      %s275 = sphi 0, %s277
      %s278 = sphi 0, %s275
      %s279 = sphi 0, %s278
      %s295 = sphi 0, %s279
      %s303 = sphi 0, %s305
      %s306 = sphi 0, %s303
      %s307 = sphi 0, %s306
      %s323 = sphi 0, %s307
    $region4: #{tpu_custom_call.1} parent=1 // loop_header_branch
      %26 = sbr.rel (%p24) target = $region8
    $region5: #{tpu_custom_call.1} parent=1 // loop_body
      %s28 = ssub.s32 %s23, 1
      %s29 = ssub.s32 %s23, 2
      %s36 = sadd.s32 1, %s31
      %p37 = scmp.ge.s32.totalorder %s36, 2
      %s38 = scalar_select %p37, 0, %s36
      %s39 = sadd.s32 1, %s30
      %s40 = scalar_select %p37, %s39, %s30
      %p41 = scmp.ge.s32.totalorder %s40, 2
      %s42 = scalar_select %p41, 0, %s40
      %s43 = ssub.s32 %s30, %s42
      %p44 = scmp.eq.s32.totalorder %s43, 0
      %s46 = sadd.s32 %s45, 1
      %s47 = scalar_select %p44, %s45, %s46
      %p50 = pneg %p44
      %p51 = scmp.eq.s32.totalorder %s23, 3
      %p52 = por %p50, %p51
      %p53 = scmp.ne.s32.totalorder %s45, %s48
      %p54 = scmp.eq.s32.totalorder %s23, 0
      %p55 = por %p53, %p54
      %p56 = scmp.ne.s32.totalorder %s45, %s48
      %p57 = scmp.eq.s32.totalorder %s28, 3
      %p58 = por %p56, %p57
      %p59 = scmp.ne.s32.totalorder %s48, %s49
      %p60 = scmp.eq.s32.totalorder %s28, 0
      %p61 = por %p59, %p60
      %p62 = scmp.ne.s32.totalorder %s48, %s49
      %p63 = scmp.eq.s32.totalorder %s29, 3
      %p64 = por %p62, %p63
      %p66 = scmp.ne.s32.totalorder %s49, %s65
      %p67 = scmp.eq.s32.totalorder %s29, 0
      %p68 = por %p66, %p67
      %s69 = ssub.s32 %s30, %s42
      %p70 = scmp.eq.s32.totalorder %s69, 0
      %s72 = sadd.s32 %s71, 1
      %s73 = scalar_select %p70, %s71, %s72
      %p76 = pneg %p70
      %p77 = scmp.eq.s32.totalorder %s23, 3
      %p78 = por %p76, %p77
      %p79 = scmp.ne.s32.totalorder %s71, %s74
      %p80 = scmp.eq.s32.totalorder %s23, 0
      %p81 = por %p79, %p80
      %p82 = scmp.ne.s32.totalorder %s71, %s74
      %p83 = scmp.eq.s32.totalorder %s28, 3
      %p84 = por %p82, %p83
      %p85 = scmp.ne.s32.totalorder %s74, %s75
      %p86 = scmp.eq.s32.totalorder %s28, 0
      %p87 = por %p85, %p86
      %p88 = scmp.ne.s32.totalorder %s74, %s75
      %p89 = scmp.eq.s32.totalorder %s29, 3
      %p90 = por %p88, %p89
      %p92 = scmp.ne.s32.totalorder %s75, %s91
      %p93 = scmp.eq.s32.totalorder %s29, 0
      %p94 = por %p92, %p93
      %s96 = sadd.s32 %s95, 1
      %p99 = scmp.eq.s32.totalorder %s23, 3
      %p100 = scmp.ne.s32.totalorder %s95, %s97
      %p101 = scmp.eq.s32.totalorder %s23, 0
      %p102 = por %p100, %p101
      %p103 = scmp.ne.s32.totalorder %s95, %s97
      %p104 = scmp.eq.s32.totalorder %s28, 3
      %p105 = por %p103, %p104
      %p106 = scmp.ne.s32.totalorder %s97, %s98
      %p107 = scmp.eq.s32.totalorder %s28, 0
      %p108 = por %p106, %p107
      %p109 = scmp.ne.s32.totalorder %s97, %s98
      %p110 = scmp.eq.s32.totalorder %s29, 3
      %p111 = por %p109, %p110
      %p113 = scmp.ne.s32.totalorder %s98, %s112
      %p114 = scmp.eq.s32.totalorder %s29, 0
      %p115 = por %p113, %p114
      %s117 = sadd.s32 %s116, 1
      %p120 = scmp.eq.s32.totalorder %s23, 3
      %p121 = scmp.ne.s32.totalorder %s116, %s118
      %p122 = scmp.eq.s32.totalorder %s23, 0
      %p123 = por %p121, %p122
      %p124 = scmp.ne.s32.totalorder %s116, %s118
      %p125 = scmp.eq.s32.totalorder %s28, 3
      %p126 = por %p124, %p125
      %p127 = scmp.ne.s32.totalorder %s118, %s119
      %p128 = scmp.eq.s32.totalorder %s28, 0
      %p129 = por %p127, %p128
      %p130 = scmp.ne.s32.totalorder %s118, %s119
      %p131 = scmp.eq.s32.totalorder %s29, 3
      %p132 = por %p130, %p131
      %p134 = scmp.ne.s32.totalorder %s119, %s133
      %p135 = scmp.eq.s32.totalorder %s29, 0
      %p136 = por %p134, %p135
      %s138 = sadd.s32 %s137, 1
      %p141 = scmp.eq.s32.totalorder %s23, 3
      %p142 = scmp.ne.s32.totalorder %s137, %s139
      %p143 = scmp.eq.s32.totalorder %s23, 0
      %p144 = por %p142, %p143
      %p145 = scmp.ne.s32.totalorder %s137, %s139
      %p146 = scmp.eq.s32.totalorder %s28, 3
      %p147 = por %p145, %p146
      %p148 = scmp.ne.s32.totalorder %s139, %s140
      %p149 = scmp.eq.s32.totalorder %s28, 0
      %p150 = por %p148, %p149
      %p151 = scmp.ne.s32.totalorder %s139, %s140
      %p152 = scmp.eq.s32.totalorder %s29, 3
      %p153 = por %p151, %p152
      %p155 = scmp.ne.s32.totalorder %s140, %s154
      %p156 = scmp.eq.s32.totalorder %s29, 0
      %p157 = por %p155, %p156
      %s159 = sadd.s32 %s158, 1
      %p162 = scmp.eq.s32.totalorder %s23, 3
      %p163 = scmp.ne.s32.totalorder %s158, %s160
      %p164 = scmp.eq.s32.totalorder %s23, 0
      %p165 = por %p163, %p164
      %p166 = scmp.ne.s32.totalorder %s158, %s160
      %p167 = scmp.eq.s32.totalorder %s28, 3
      %p168 = por %p166, %p167
      %p169 = scmp.ne.s32.totalorder %s160, %s161
      %p170 = scmp.eq.s32.totalorder %s28, 0
      %p171 = por %p169, %p170
      %p172 = scmp.ne.s32.totalorder %s160, %s161
      %p173 = scmp.eq.s32.totalorder %s29, 3
      %p174 = por %p172, %p173
      %p176 = scmp.ne.s32.totalorder %s161, %s175
      %p177 = scmp.eq.s32.totalorder %s29, 0
      %p178 = por %p176, %p177
      %s180 = sadd.s32 %s179, 1
      %p183 = scmp.eq.s32.totalorder %s23, 3
      %p184 = scmp.ne.s32.totalorder %s179, %s181
      %p185 = scmp.eq.s32.totalorder %s23, 0
      %p186 = por %p184, %p185
      %p187 = scmp.ne.s32.totalorder %s179, %s181
      %p188 = scmp.eq.s32.totalorder %s28, 3
      %p189 = por %p187, %p188
      %p190 = scmp.ne.s32.totalorder %s181, %s182
      %p191 = scmp.eq.s32.totalorder %s28, 0
      %p192 = por %p190, %p191
      %p193 = scmp.ne.s32.totalorder %s181, %s182
      %p194 = scmp.eq.s32.totalorder %s29, 3
      %p195 = por %p193, %p194
      %p197 = scmp.ne.s32.totalorder %s182, %s196
      %p198 = scmp.eq.s32.totalorder %s29, 0
      %p199 = por %p197, %p198
      %s201 = sadd.s32 %s200, 1
      %p204 = scmp.eq.s32.totalorder %s23, 3
      %p205 = scmp.ne.s32.totalorder %s200, %s202
      %p206 = scmp.eq.s32.totalorder %s23, 0
      %p207 = por %p205, %p206
      %p208 = scmp.ne.s32.totalorder %s200, %s202
      %p209 = scmp.eq.s32.totalorder %s28, 3
      %p210 = por %p208, %p209
      %p211 = scmp.ne.s32.totalorder %s202, %s203
      %p212 = scmp.eq.s32.totalorder %s28, 0
      %p213 = por %p211, %p212
      %p214 = scmp.ne.s32.totalorder %s202, %s203
      %p215 = scmp.eq.s32.totalorder %s29, 3
      %p216 = por %p214, %p215
      %p218 = scmp.ne.s32.totalorder %s203, %s217
      %p219 = scmp.eq.s32.totalorder %s29, 0
      %p220 = por %p218, %p219
      %s221 = ssub.s32 %s31, %s38
      %p222 = scmp.eq.s32.totalorder %s221, 0
      %s224 = sadd.s32 %s223, 1
      %s225 = scalar_select %p222, %s223, %s224
      %p228 = pneg %p222
      %p229 = scmp.eq.s32.totalorder %s23, 3
      %p230 = por %p228, %p229
      %p231 = scmp.ne.s32.totalorder %s223, %s226
      %p232 = scmp.eq.s32.totalorder %s23, 0
      %p233 = por %p231, %p232
      %p234 = scmp.ne.s32.totalorder %s223, %s226
      %p235 = scmp.eq.s32.totalorder %s28, 3
      %p236 = por %p234, %p235
      %p237 = scmp.ne.s32.totalorder %s226, %s227
      %p238 = scmp.eq.s32.totalorder %s28, 0
      %p239 = por %p237, %p238
      %p240 = scmp.ne.s32.totalorder %s226, %s227
      %p241 = scmp.eq.s32.totalorder %s29, 3
      %p242 = por %p240, %p241
      %p244 = scmp.ne.s32.totalorder %s227, %s243
      %p245 = scmp.eq.s32.totalorder %s29, 0
      %p246 = por %p244, %p245
      %s247 = ssub.s32 %s31, %s38
      %p248 = scmp.eq.s32.totalorder %s247, 0
      %s250 = sadd.s32 %s249, 1
      %s251 = scalar_select %p248, %s249, %s250
      %p254 = pneg %p248
      %p255 = scmp.eq.s32.totalorder %s23, 3
      %p256 = por %p254, %p255
      %p257 = scmp.ne.s32.totalorder %s249, %s252
      %p258 = scmp.eq.s32.totalorder %s23, 0
      %p259 = por %p257, %p258
      %p260 = scmp.ne.s32.totalorder %s249, %s252
      %p261 = scmp.eq.s32.totalorder %s28, 3
      %p262 = por %p260, %p261
      %p263 = scmp.ne.s32.totalorder %s252, %s253
      %p264 = scmp.eq.s32.totalorder %s28, 0
      %p265 = por %p263, %p264
      %p266 = scmp.ne.s32.totalorder %s252, %s253
      %p267 = scmp.eq.s32.totalorder %s29, 3
      %p268 = por %p266, %p267
      %p270 = scmp.ne.s32.totalorder %s253, %s269
      %p271 = scmp.eq.s32.totalorder %s29, 0
      %p272 = por %p270, %p271
      %s273 = ssub.s32 %s31, %s38
      %p274 = scmp.eq.s32.totalorder %s273, 0
      %s276 = sadd.s32 %s275, 1
      %s277 = scalar_select %p274, %s275, %s276
      %p280 = pneg %p274
      %p281 = scmp.eq.s32.totalorder %s23, 3
      %p282 = por %p280, %p281
      %p283 = scmp.ne.s32.totalorder %s275, %s278
      %p284 = scmp.eq.s32.totalorder %s23, 0
      %p285 = por %p283, %p284
      %p286 = scmp.ne.s32.totalorder %s275, %s278
      %p287 = scmp.eq.s32.totalorder %s28, 3
      %p288 = por %p286, %p287
      %p289 = scmp.ne.s32.totalorder %s278, %s279
      %p290 = scmp.eq.s32.totalorder %s28, 0
      %p291 = por %p289, %p290
      %p292 = scmp.ne.s32.totalorder %s278, %s279
      %p293 = scmp.eq.s32.totalorder %s29, 3
      %p294 = por %p292, %p293
      %p296 = scmp.ne.s32.totalorder %s279, %s295
      %p297 = scmp.eq.s32.totalorder %s29, 0
      %p298 = por %p296, %p297
      %s299 = ssub.s32 %s30, %s42
      %s300 = ssub.s32 %s31, %s38
      %s301 = sor.u32 %s299, %s300
      %p302 = scmp.eq.s32.totalorder %s301, 0
      %s304 = sadd.s32 %s303, 1
      %s305 = scalar_select %p302, %s303, %s304
      %p308 = pneg %p302
      %p309 = scmp.eq.s32.totalorder %s23, 3
      %p310 = por %p308, %p309
      %p311 = scmp.ne.s32.totalorder %s303, %s306
      %p312 = scmp.eq.s32.totalorder %s23, 0
      %p313 = por %p311, %p312
      %p314 = scmp.ne.s32.totalorder %s303, %s306
      %p315 = scmp.eq.s32.totalorder %s28, 3
      %p316 = por %p314, %p315
      %p317 = scmp.ne.s32.totalorder %s306, %s307
      %p318 = scmp.eq.s32.totalorder %s28, 0
      %p319 = por %p317, %p318
      %p320 = scmp.ne.s32.totalorder %s306, %s307
      %p321 = scmp.eq.s32.totalorder %s29, 3
      %p322 = por %p320, %p321
      %p324 = scmp.ne.s32.totalorder %s307, %s323
      %p325 = scmp.eq.s32.totalorder %s29, 0
      %p326 = por %p324, %p325
      %p327 = scmp.le.s32.totalorder 1, %s23
      %p328 = scmp.lt.s32.totalorder %s23, 5
      %p329 = pnand %p327, %p328
      %p330 = pneg %p329
      // Predicated region
      $region9: #{tpu_custom_call.1} parent=5 // pred_check
        _
      $region10: #{tpu_custom_call.1} parent=5 // pred_check_branch
        %332 = sbr.rel (%p329) target = $region12
      $region11: #{tpu_custom_call.1} parent=5 // pred_region
        %s333 = ssub.s32 %s23, 1
        // Predicated region
        $region13: #{tpu_custom_call.1} parent=11 // pred_check
          %p334 = pneg %p108
        $region14: #{tpu_custom_call.1} parent=11 // pred_check_branch
          %336 = sbr.rel (%p334) target = $region16
        $region15: #{tpu_custom_call.1} parent=11 // pred_region
          _
        $region16: #{tpu_custom_call.1} parent=11 // pred_fallthru
          _
        // Predicated region
        $region17: #{tpu_custom_call.1} parent=11 // pred_check
          %p337 = pneg %p129
        $region18: #{tpu_custom_call.1} parent=11 // pred_check_branch
          %339 = sbr.rel (%p337) target = $region20
        $region19: #{tpu_custom_call.1} parent=11 // pred_region
          _
        $region20: #{tpu_custom_call.1} parent=11 // pred_fallthru
          _
        // Predicated region
        $region21: #{tpu_custom_call.1} parent=11 // pred_check
          %p340 = pneg %p150
        $region22: #{tpu_custom_call.1} parent=11 // pred_check_branch
          %342 = sbr.rel (%p340) target = $region24
        $region23: #{tpu_custom_call.1} parent=11 // pred_region
          _
        $region24: #{tpu_custom_call.1} parent=11 // pred_fallthru
          _
        // Predicated region
        $region25: #{tpu_custom_call.1} parent=11 // pred_check
          %p343 = pneg %p171
        $region26: #{tpu_custom_call.1} parent=11 // pred_check_branch
          %345 = sbr.rel (%p343) target = $region28
        $region27: #{tpu_custom_call.1} parent=11 // pred_region
          _
        $region28: #{tpu_custom_call.1} parent=11 // pred_fallthru
          _
        // Predicated region
        $region29: #{tpu_custom_call.1} parent=11 // pred_check
          %p346 = pneg %p192
        $region30: #{tpu_custom_call.1} parent=11 // pred_check_branch
          %348 = sbr.rel (%p346) target = $region32
        $region31: #{tpu_custom_call.1} parent=11 // pred_region
          _
        $region32: #{tpu_custom_call.1} parent=11 // pred_fallthru
          _
        // Predicated region
        $region33: #{tpu_custom_call.1} parent=11 // pred_check
          %p349 = pneg %p213
        $region34: #{tpu_custom_call.1} parent=11 // pred_check_branch
          %351 = sbr.rel (%p349) target = $region36
        $region35: #{tpu_custom_call.1} parent=11 // pred_region
          _
        $region36: #{tpu_custom_call.1} parent=11 // pred_fallthru
          _
      $region12: #{tpu_custom_call.1} parent=5 // pred_fallthru
        _
      %p352 = scmp.lt.s32.totalorder %s23, 4
      // Predicated region
      $region37: #{tpu_custom_call.1} parent=5 // pred_check
        %p353 = pneg %p352
      $region38: #{tpu_custom_call.1} parent=5 // pred_check_branch
        %355 = sbr.rel (%p353) target = $region40
      $region39: #{tpu_custom_call.1} parent=5 // pred_region
        // Predicated region
        $region41: #{tpu_custom_call.1} parent=39 // pred_check
          %p356 = pneg %p55
        $region42: #{tpu_custom_call.1} parent=39 // pred_check_branch
          %358 = sbr.rel (%p356) target = $region44
        $region43: #{tpu_custom_call.1} parent=39 // pred_region
          %s359 = smul.u32 2, %s30
          %p360 = scmp.lt.s32.totalorder %s359, 3
          %s361 = scalar_select %p360, %s359, 3
          %s362 = smul.addr %s361, 8
          %s363 = scalar_lea.vmem %s0, %s362
          %s364 = smul.u32 2, %s30
        $region44: #{tpu_custom_call.1} parent=39 // pred_fallthru
          _
        // Predicated region
        $region45: #{tpu_custom_call.1} parent=39 // pred_check
          %p365 = pneg %p81
        $region46: #{tpu_custom_call.1} parent=39 // pred_check_branch
          %367 = sbr.rel (%p365) target = $region48
        $region47: #{tpu_custom_call.1} parent=39 // pred_region
          %s368 = smul.u32 2, %s30
          %p369 = scmp.lt.s32.totalorder %s368, 3
          %s370 = scalar_select %p369, %s368, 3
          %s371 = smul.addr %s370, 8
          %s372 = scalar_lea.vmem %s1, %s371
          %s373 = smul.u32 2, %s30
        $region48: #{tpu_custom_call.1} parent=39 // pred_fallthru
          _
        // Predicated region
        $region49: #{tpu_custom_call.1} parent=39 // pred_check
          %p374 = pneg %p233
        $region50: #{tpu_custom_call.1} parent=39 // pred_check_branch
          %376 = sbr.rel (%p374) target = $region52
        $region51: #{tpu_custom_call.1} parent=39 // pred_region
          %s377 = sand.u32 %s223, 1
          %s378 = scalar_lea.sflag [#allocation4], %s377
          %s379 = sand.u32 %s223, 1
          %s380 = smul.addr %s379, 64
          %s381 = scalar_lea.vmem [#allocation3], %s380
          %383 = vsyncadd %s378, 0
          %s384 = smul.addr %s31, 4
          %s385 = scalar_lea.hbm %s8, %s384
          %s386 = sshll.u32 %s385, 4
          %s387 = int_to_ptr.hbm [resolvable:$true] %s386
          %s388 = sshll.u32 %s381, 4
          %s389 = int_to_ptr.vmem [resolvable:$true] %s388
          %394 = dma.hbm_to_vmem [thread:$0]  %s387, 1024, %s389, %s378, 128, 64, 4
        $region52: #{tpu_custom_call.1} parent=39 // pred_fallthru
          _
        // Predicated region
        $region53: #{tpu_custom_call.1} parent=39 // pred_check
          %p395 = pneg %p259
        $region54: #{tpu_custom_call.1} parent=39 // pred_check_branch
          %397 = sbr.rel (%p395) target = $region56
        $region55: #{tpu_custom_call.1} parent=39 // pred_region
          %p398 = scmp.lt.s32.totalorder %s31, 1
          %s399 = scalar_select %p398, %s31, 1
          %s400 = smul.addr %s399, 4
          %s401 = scalar_lea.vmem %s9, %s400
        $region56: #{tpu_custom_call.1} parent=39 // pred_fallthru
          _
        // Predicated region
        $region57: #{tpu_custom_call.1} parent=39 // pred_check
          %p402 = pneg %p285
        $region58: #{tpu_custom_call.1} parent=39 // pred_check_branch
          %404 = sbr.rel (%p402) target = $region60
        $region59: #{tpu_custom_call.1} parent=39 // pred_region
          %p405 = scmp.lt.s32.totalorder %s31, 1
          %s406 = scalar_select %p405, %s31, 1
          %s407 = scalar_lea.vmem %s10, %s406
        $region60: #{tpu_custom_call.1} parent=39 // pred_fallthru
          _
      $region40: #{tpu_custom_call.1} parent=5 // pred_fallthru
        _
      %p408 = scmp.le.s32.totalorder 1, %s23
      %p409 = scmp.lt.s32.totalorder %s23, 5
      %p410 = pnand %p408, %p409
      %p411 = pneg %p410
      // Predicated region
      $region61: #{tpu_custom_call.1} parent=5 // pred_check
        _
      $region62: #{tpu_custom_call.1} parent=5 // pred_check_branch
        %413 = sbr.rel (%p410) target = $region64
      $region63: #{tpu_custom_call.1} parent=5 // pred_region
        %s414 = ssub.s32 %s23, 1
        %s415 = sand.u32 %s226, 1
        %s416 = scalar_lea.sflag [#allocation4], %s415
        %s417 = sand.u32 %s226, 1
        %s418 = smul.addr %s417, 64
        %s419 = scalar_lea.vmem [#allocation3], %s418
        // Predicated region
        $region65: #{tpu_custom_call.1} parent=63 // pred_check
          %p420 = pneg %p239
        $region66: #{tpu_custom_call.1} parent=63 // pred_check_branch
          %422 = sbr.rel (%p420) target = $region68
        $region67: #{tpu_custom_call.1} parent=63 // pred_region
          %424 = dma.done %s416, 1024
        $region68: #{tpu_custom_call.1} parent=63 // pred_fallthru
          _
        %s425 = smul.u32 2, %s32
        %p426 = scmp.lt.s32.totalorder %s425, 3
        %s427 = scalar_select %p426, %s425, 3
        %s428 = smul.addr %s427, 8
        %s429 = scalar_lea.vmem %s0, %s428
        %p430 = pneg %p61
        %p431 = pneg %p58
        %s432 = smul.u32 2, %s32
        %p433 = scmp.lt.s32.totalorder %s432, 3
        %s434 = scalar_select %p433, %s432, 3
        %s435 = smul.addr %s434, 8
        %s436 = scalar_lea.vmem %s1, %s435
        %p437 = pneg %p87
        %p438 = pneg %p84
        %p439 = pneg %p108
        %p440 = pneg %p105
        %p441 = pneg %p129
        %p442 = pneg %p126
        %p443 = pneg %p150
        %p444 = pneg %p147
        %p445 = pneg %p171
        %p446 = pneg %p168
        %p447 = pneg %p192
        %p448 = pneg %p189
        %p449 = pneg %p213
        %p450 = pneg %p210
        %s451 = sand.u32 %s226, 1
        %s452 = scalar_lea.sflag [#allocation4], %s451
        %s453 = sand.u32 %s226, 1
        %s454 = smul.addr %s453, 64
        %s455 = scalar_lea.vmem [#allocation3], %s454
        %p456 = pneg %p239
        %p457 = pneg %p236
        %p458 = scmp.lt.s32.totalorder %s33, 1
        %s459 = scalar_select %p458, %s33, 1
        %s460 = smul.addr %s459, 4
        %s461 = scalar_lea.vmem %s9, %s460
        %p462 = pneg %p265
        %p463 = pneg %p262
        %p464 = scmp.lt.s32.totalorder %s33, 1
        %s465 = scalar_select %p464, %s33, 1
        %s466 = scalar_lea.vmem %s10, %s465
        %p467 = pneg %p291
        %p468 = pneg %p288
        %p469 = pneg %p319
        %p470 = pneg %p316
        %s471 = sand.u32 %s306, 1
        %s472 = scalar_lea.sflag [#allocation5], %s471
        %s473 = sand.u32 %s306, 1
        %s474 = smul.addr %s473, 16
        %s475 = scalar_lea.vmem [#allocation6], %s474
        %s476 = smul.u32 2, %s32
        %p477 = scmp.lt.s32.totalorder %s476, 3
        %s478 = scalar_select %p477, %s476, 3
        %s479 = smul.addr %s478, 8
        %s480 = scalar_lea.vmem %s0, %s479
        %s481 = smul.u32 2, %s32
        %s482 = smul.u32 2, %s32
        %p483 = scmp.lt.s32.totalorder %s482, 3
        %s484 = scalar_select %p483, %s482, 3
        %s485 = smul.addr %s484, 8
        %s486 = scalar_lea.vmem %s1, %s485
        %s487 = smul.u32 2, %s32
        %p488 = scmp.lt.s32.totalorder %s33, 1
        %s489 = scalar_select %p488, %s33, 1
        %s490 = smul.addr %s489, 4
        %s491 = scalar_lea.vmem %s9, %s490
        %p492 = scmp.lt.s32.totalorder %s33, 1
        %s493 = scalar_select %p492, %s33, 1
        %s494 = scalar_lea.vmem %s10, %s493
        %s495 = smul.u32 2, %s32
        %p497 = scmp.eq.s32.totalorder %s33, 0
        // Predicated region
        $region69: #{tpu_custom_call.1} parent=63 // pred_check
          %p498 = pneg %p497
        $region70: #{tpu_custom_call.1} parent=63 // pred_check_branch
          %500 = sbr.rel (%p498) target = $region72
        $region71: #{tpu_custom_call.1} parent=63 // pred_region
          %v501 = vld [vmem:[%s480] sm:$0xff]
          %v502 = vld [vmem:[%s480 + $0x8] sm:$0xff]
          %v503 = vpack.c.bf16 %v502, %v501
          %v504 = vld [vmem:[%s486] sm:$0xff]
          %v505 = vld [vmem:[%s486 + $0x8] sm:$0xff]
          %v506 = vpack.c.bf16 %v505, %v504
          %v507 = vld [vmem:[%s2] sm:$0xf]
          %v508 = vld [vmem:[%s2 + $0x4] sm:$0xf]
          %v509 = vld [vmem:[%s3] sm:$0xf]
          %vm510 = vcmask 64512
          %v512 = vsel %vm510, %v506, 0
          %vm514 = vcmask 1043456
          %v516 = vsel %vm514, %v509, 0
          %518 = vmatpush.bf16.msra.mxu0 0
          %519 = vmatpush.bf16.msra.mxu0 0
          %520 = vmatpush.bf16.msra.mxu0 0
          %521 = vmatpush.bf16.msra.mxu0 0
          %522 = vmatpush.bf16.msra.mxu0 0
          %523 = vmatpush.bf16.msra.mxu0 0
          %524 = vmatpush.bf16.msra.mxu0 0
          %525 = vmatpush.bf16.msra.mxu0 %v516
          %526 = vmatmul.bf16.gmra.mxu0 %v512
          %v527 = vpop.f32.mrf.mxu0
          %v528 = vadd.f32 0.0, %v527
          %v529 = vpop.f32.mrf.mxu0
          %v530 = vadd.f32 0.0, %v529
          %531 = vdwg.mxu0
          %v534 = vunpack.c.l.b16 %v507
          %v535 = vunpack.c.l.b16 %v508
          %v536 = vpack.c.b16 %v535, %v534
          %vm538 = vcmask 130048
          %v540 = vsel %vm538, %v503, 0
          %542 = vmatpush.bf16.msra.mxu0 0
          %543 = vmatpush.bf16.msra.mxu0 0
          %544 = vmatpush.bf16.msra.mxu0 0
          %545 = vmatpush.bf16.msra.mxu0 0
          %546 = vmatpush.bf16.msra.mxu0 0
          %547 = vmatpush.bf16.msra.mxu0 0
          %548 = vmatpush.bf16.msra.mxu0 0
          %549 = vmatpush.bf16.msra.mxu0 %v536
          %550 = vmatmul.bf16.gmra.mxu0 %v540
          %v551 = vpop.f32.mrf.mxu0
          %v552 = vadd.f32 %v528, %v551
          %v553 = vpop.f32.mrf.mxu0
          %v554 = vadd.f32 %v530, %v553
          %555 = vdwg.mxu0
          %v556 = vld [vmem:[%s4] sm:$0x1]
          %v558 = vperm.slane %v556, 0
          %v560 = vadd.f32 %v552, %v558
          %v561 = vadd.f32 %v554, %v558
          %v562 = vmax.f32 %v560, 0.0
          %v563 = vmax.f32 %v561, 0.0
          %v564 = vpack.c.bf16 %v563, %v562
          %v565 = vld [vmem:[%s5] sm:$0xf]
          %v566 = vld [vmem:[%s5 + $0x4] sm:$0xf]
          %v567 = vld [vmem:[%s5 + $0x8] sm:$0xf]
          %v568 = vld [vmem:[%s5 + $0xc] sm:$0xf]
          %v569 = vld [vmem:[%s5 + $0x10] sm:$0xf]
          %v570 = vld [vmem:[%s5 + $0x14] sm:$0xf]
          %v571 = vld [vmem:[%s5 + $0x18] sm:$0xf]
          %v572 = vld [vmem:[%s5 + $0x1c] sm:$0xf]
          %v573 = vld [vmem:[%s5 + $0x20] sm:$0xf]
          %v574 = vld [vmem:[%s5 + $0x24] sm:$0xf]
          %v575 = vld [vmem:[%s5 + $0x28] sm:$0xf]
          %v576 = vld [vmem:[%s5 + $0x2c] sm:$0xf]
          %v577 = vld [vmem:[%s5 + $0x30] sm:$0xf]
          %v578 = vld [vmem:[%s5 + $0x34] sm:$0xf]
          %v579 = vld [vmem:[%s5 + $0x38] sm:$0xf]
          %v580 = vld [vmem:[%s5 + $0x3c] sm:$0xf]
          %v581 = vld [vmem:[%s6] sm:$0xf]
          %v583 = vsel %vm514, %v581, 0
          %585 = vmatpush.bf16.msra.mxu0 0
          %586 = vmatpush.bf16.msra.mxu0 0
          %587 = vmatpush.bf16.msra.mxu0 0
          %588 = vmatpush.bf16.msra.mxu0 0
          %589 = vmatpush.bf16.msra.mxu0 0
          %590 = vmatpush.bf16.msra.mxu0 0
          %591 = vmatpush.bf16.msra.mxu0 0
          %592 = vmatpush.bf16.msra.mxu0 %v583
          %593 = vmatmul.bf16.gmra.mxu0 %v512
          %v594 = vpop.f32.mrf.mxu0
          %v595 = vadd.f32 0.0, %v594
          %v596 = vpop.f32.mrf.mxu0
          %v597 = vadd.f32 0.0, %v596
          %598 = vdwg.mxu0
          %v615 = vunpack.c.l.b16 %v565
          %v616 = vunpack.c.l.b16 %v566
          %v617 = vunpack.c.l.b16 %v567
          %v618 = vunpack.c.l.b16 %v568
          %v619 = vunpack.c.l.b16 %v569
          %v620 = vunpack.c.l.b16 %v570
          %v621 = vunpack.c.l.b16 %v571
          %v622 = vunpack.c.l.b16 %v572
          %v623 = vunpack.c.l.b16 %v573
          %v624 = vunpack.c.l.b16 %v574
          %v625 = vunpack.c.l.b16 %v575
          %v626 = vunpack.c.l.b16 %v576
          %v627 = vunpack.c.l.b16 %v577
          %v628 = vunpack.c.l.b16 %v578
          %v629 = vunpack.c.l.b16 %v579
          %v630 = vunpack.c.l.b16 %v580
          %v631 = vpack.c.b16 %v616, %v615
          %v632 = vpack.c.b16 %v618, %v617
          %v633 = vpack.c.b16 %v620, %v619
          %v634 = vpack.c.b16 %v622, %v621
          %v635 = vpack.c.b16 %v624, %v623
          %v636 = vpack.c.b16 %v626, %v625
          %v637 = vpack.c.b16 %v628, %v627
          %v638 = vpack.c.b16 %v630, %v629
          %647 = vmatpush.bf16.msra.mxu0 %v638
          %648 = vmatpush.bf16.msra.mxu0 %v637
          %649 = vmatpush.bf16.msra.mxu0 %v636
          %650 = vmatpush.bf16.msra.mxu0 %v635
          %651 = vmatpush.bf16.msra.mxu0 %v634
          %652 = vmatpush.bf16.msra.mxu0 %v633
          %653 = vmatpush.bf16.msra.mxu0 %v632
          %654 = vmatpush.bf16.msra.mxu0 %v631
          %655 = vmatmul.bf16.gmra.mxu0 %v564
          %v656 = vpop.f32.mrf.mxu0
          %v657 = vadd.f32 %v595, %v656
          %v658 = vpop.f32.mrf.mxu0
          %v659 = vadd.f32 %v597, %v658
          %660 = vdwg.mxu0
          %v661 = vld [vmem:[%s7] sm:$0x1]
          %v663 = vperm.slane %v661, 0
          %v665 = vadd.f32 %v657, %v663
          %v666 = vadd.f32 %v659, %v663
          %v667 = vmax.f32 %v665, 0.0
          %v668 = vmax.f32 %v666, 0.0
          %v669 = vpack.c.bf16 %v667, %v667
          %v670 = vpack.c.bf16 %v668, %v668
          %v671 = vunpack.c.l.bf16 %v669
          %v672 = vunpack.c.l.bf16 %v670
          %673 = vst [vmem:[#allocation2] sm:$0xff] %v671
          %674 = vst [vmem:[#allocation2 + $0x8] sm:$0xff] %v672
        $region72: #{tpu_custom_call.1} parent=63 // pred_fallthru
          _
        %v675 = vld [vmem:[#allocation2] sm:$0xff]
        %v676 = vld [vmem:[#allocation2 + $0x8] sm:$0xff]
        %v677 = vpack.c.bf16 %v676, %v675
        %v678 = vld [vmem:[%s419] sm:$0xf]
        %v679 = vld [vmem:[%s419 + $0x4] sm:$0xf]
        %v680 = vld [vmem:[%s419 + $0x8] sm:$0xf]
        %v681 = vld [vmem:[%s419 + $0xc] sm:$0xf]
        %v682 = vld [vmem:[%s419 + $0x10] sm:$0xf]
        %v683 = vld [vmem:[%s419 + $0x14] sm:$0xf]
        %v684 = vld [vmem:[%s419 + $0x18] sm:$0xf]
        %v685 = vld [vmem:[%s419 + $0x1c] sm:$0xf]
        %v686 = vld [vmem:[%s419 + $0x20] sm:$0xf]
        %v687 = vld [vmem:[%s419 + $0x24] sm:$0xf]
        %v688 = vld [vmem:[%s419 + $0x28] sm:$0xf]
        %v689 = vld [vmem:[%s419 + $0x2c] sm:$0xf]
        %v690 = vld [vmem:[%s419 + $0x30] sm:$0xf]
        %v691 = vld [vmem:[%s419 + $0x34] sm:$0xf]
        %v692 = vld [vmem:[%s419 + $0x38] sm:$0xf]
        %v693 = vld [vmem:[%s419 + $0x3c] sm:$0xf]
        %v694 = vld [vmem:[%s486] sm:$0xff]
        %v695 = vld [vmem:[%s486 + $0x8] sm:$0xff]
        %v696 = vpack.c.bf16 %v695, %v694
        %v697 = vld [vmem:[%s491] sm:$0xf]
        %vm698 = vcmask 64512
        %v700 = vsel %vm698, %v696, 0
        %vm702 = vcmask 1043456
        %v704 = vsel %vm702, %v697, 0
        %706 = vmatpush.bf16.msra.mxu0 0
        %707 = vmatpush.bf16.msra.mxu0 0
        %708 = vmatpush.bf16.msra.mxu0 0
        %709 = vmatpush.bf16.msra.mxu0 0
        %710 = vmatpush.bf16.msra.mxu0 0
        %711 = vmatpush.bf16.msra.mxu0 0
        %712 = vmatpush.bf16.msra.mxu0 0
        %713 = vmatpush.bf16.msra.mxu0 %v704
        %714 = vmatmul.bf16.gmra.mxu0 %v700
        %v715 = vpop.f32.mrf.mxu0
        %v716 = vadd.f32 0.0, %v715
        %v717 = vpop.f32.mrf.mxu0
        %v718 = vadd.f32 0.0, %v717
        %719 = vdwg.mxu0
        %v736 = vunpack.c.l.b16 %v678
        %v737 = vunpack.c.l.b16 %v679
        %v738 = vunpack.c.l.b16 %v680
        %v739 = vunpack.c.l.b16 %v681
        %v740 = vunpack.c.l.b16 %v682
        %v741 = vunpack.c.l.b16 %v683
        %v742 = vunpack.c.l.b16 %v684
        %v743 = vunpack.c.l.b16 %v685
        %v744 = vunpack.c.l.b16 %v686
        %v745 = vunpack.c.l.b16 %v687
        %v746 = vunpack.c.l.b16 %v688
        %v747 = vunpack.c.l.b16 %v689
        %v748 = vunpack.c.l.b16 %v690
        %v749 = vunpack.c.l.b16 %v691
        %v750 = vunpack.c.l.b16 %v692
        %v751 = vunpack.c.l.b16 %v693
        %v752 = vpack.c.b16 %v737, %v736
        %v753 = vpack.c.b16 %v739, %v738
        %v754 = vpack.c.b16 %v741, %v740
        %v755 = vpack.c.b16 %v743, %v742
        %v756 = vpack.c.b16 %v745, %v744
        %v757 = vpack.c.b16 %v747, %v746
        %v758 = vpack.c.b16 %v749, %v748
        %v759 = vpack.c.b16 %v751, %v750
        %768 = vmatpush.bf16.msra.mxu0 %v759
        %769 = vmatpush.bf16.msra.mxu0 %v758
        %770 = vmatpush.bf16.msra.mxu0 %v757
        %771 = vmatpush.bf16.msra.mxu0 %v756
        %772 = vmatpush.bf16.msra.mxu0 %v755
        %773 = vmatpush.bf16.msra.mxu0 %v754
        %774 = vmatpush.bf16.msra.mxu0 %v753
        %775 = vmatpush.bf16.msra.mxu0 %v752
        %776 = vmatmul.bf16.gmra.mxu0 %v677
        %v777 = vpop.f32.mrf.mxu0
        %v778 = vadd.f32 %v716, %v777
        %v779 = vpop.f32.mrf.mxu0
        %v780 = vadd.f32 %v718, %v779
        %781 = vdwg.mxu0
        %v782 = vld [vmem:[%s494] sm:$0x1]
        %v784 = vperm.slane %v782, 0
        %v786 = vadd.f32 %v778, %v784
        %v787 = vadd.f32 %v780, %v784
        %788 = vst [vmem:[%s475] sm:$0xff] %v786
        %789 = vst [vmem:[%s475 + $0x8] sm:$0xff] %v787
        %s790 = sand.u32 %s306, 1
        %s791 = scalar_lea.sflag [#allocation5], %s790
        %s792 = sand.u32 %s306, 1
        %s793 = smul.addr %s792, 16
        %s794 = scalar_lea.vmem [#allocation6], %s793
        // Predicated region
        $region73: #{tpu_custom_call.1} parent=63 // pred_check
          %p795 = pneg %p316
        $region74: #{tpu_custom_call.1} parent=63 // pred_check_branch
          %797 = sbr.rel (%p795) target = $region76
        $region75: #{tpu_custom_call.1} parent=63 // pred_region
          %s798 = smul.u32 2, %s32
          %800 = vsyncadd %s791, 0
          %s801 = smul.addr %s798, 2
          %s802 = sadd.s32 %s33, %s801
          %s803 = smul.addr %s802, 8
          %s804 = scalar_lea.hbm %s11, %s803
          %s805 = sshll.u32 %s794, 4
          %s806 = int_to_ptr.vmem [resolvable:$true] %s805
          %s807 = sshll.u32 %s804, 4
          %s808 = int_to_ptr.hbm [resolvable:$true] %s807
          %813 = dma.vmem_to_hbm [thread:$0]  %s806, 256, %s808, %s791, 128, 256, 8
        $region76: #{tpu_custom_call.1} parent=63 // pred_fallthru
          _
      $region64: #{tpu_custom_call.1} parent=5 // pred_fallthru
        _
      %p814 = scmp.le.s32.totalorder 2, %s23
      // Predicated region
      $region77: #{tpu_custom_call.1} parent=5 // pred_check
        %p815 = pneg %p814
      $region78: #{tpu_custom_call.1} parent=5 // pred_check_branch
        %817 = sbr.rel (%p815) target = $region80
      $region79: #{tpu_custom_call.1} parent=5 // pred_region
        %s818 = ssub.s32 %s23, 2
        // Predicated region
        $region81: #{tpu_custom_call.1} parent=79 // pred_check
          %p819 = pneg %p322
        $region82: #{tpu_custom_call.1} parent=79 // pred_check_branch
          %821 = sbr.rel (%p819) target = $region84
        $region83: #{tpu_custom_call.1} parent=79 // pred_region
          %s822 = sand.u32 %s307, 1
          %s823 = scalar_lea.sflag [#allocation5], %s822
          %s824 = sand.u32 %s307, 1
          %s825 = smul.addr %s824, 16
          %s826 = scalar_lea.vmem [#allocation6], %s825
          %828 = dma.done %s823, 256
        $region84: #{tpu_custom_call.1} parent=79 // pred_fallthru
          _
      $region80: #{tpu_custom_call.1} parent=5 // pred_fallthru
        _
    $region6: #{tpu_custom_call.1} parent=1 // loop_footer
      %s27 = sadd.s32 1, %s23
    $region7: #{tpu_custom_call.1} parent=1 // loop_footer_branch
      %22 = sbr.rel target = $region3
    $region8: #{tpu_custom_call.1} parent=1 // loop_exit
      _
    %829 = vsyncpa [#allocation4], 1
    %s830 = scalar_lea.sflag [#allocation4], 1
    %831 = vsyncpa %s830, 1
    %832 = vsyncpa [#allocation5], 1
    %s833 = scalar_lea.sflag [#allocation5], 1
    %834 = vsyncpa %s833, 1

</llo_original>
